<compile_context>
chip_gen: v6e
topology: v6e:2x2x1
jax: 0.10.0
libtpu: 0.0.40
codegen_flags: <defaults>
</compile_context>

<pallas_src>
import math
import functools

import jax
import jax.numpy as jnp
from jax import lax
from jax.experimental import pallas as pl
from jax.experimental.pallas import tpu as pltpu

_VMEM_LIMIT = 64 * 1024 * 1024   # explicit scoped-VMEM budget (ok on v5e/v6e/v7x)
_GUARD = 8                       # zero guard rows around the flattened halo tile


def _round_up(x, m):
    return ((x + m - 1) // m) * m


# ----------------------------------------------------------------------------
# Pallas kernel 1: fused conv tower (tap accumulation), one (level, image) per
# grid step.  The activation lives in a VMEM scratch laid out as a flattened,
# spatially padded canvas so every 3x3 tap is a contiguous row-shifted slice.
# ----------------------------------------------------------------------------
def _tower_kernel(x_ref, m_ref, *refs, layer_specs, Pflat, Wp, G, prec):
    nl = len(layer_specs)
    wrefs = refs[0:2 * nl:2]
    brefs = refs[1:2 * nl:2]
    o_ref = refs[2 * nl]
    buf = refs[2 * nl + 1]
    cbuf = buf.shape[-1]

    # zero the guard rows (border taps read them), then load the canvas.
    zg = jnp.zeros((G, cbuf), buf.dtype)
    buf[0:G] = zg
    buf[G + Pflat:2 * G + Pflat] = zg
    cin0 = layer_specs[0][0]
    buf[G:G + Pflat, :cin0] = x_ref[0, 0]
    mask = m_ref[0]                                   # (Pflat, 1) float32

    for li, (cin, cout, relu) in enumerate(layer_specs):
        w_l = wrefs[li]
        acc = None
        for t in range(9):                            # 3x3 taps
            ky, kx = divmod(t, 3)
            start = G + (ky - 1) * Wp + (kx - 1)
            xs = buf[start:start + Pflat, :cin]
            c = jnp.dot(xs, w_l[t], preferred_element_type=jnp.float32,
                        precision=prec)
            acc = c if acc is None else acc + c
        acc = acc + brefs[li][...]                    # f32 epilogue
        if relu:
            acc = jnp.maximum(acc, 0.0)
        if li < nl - 1:
            # re-zero everything outside this level's valid g x g region so the
            # next layer sees exact "same"-padding semantics; activation stays
            # resident in VMEM (never written to HBM).
            buf[G:G + Pflat, :cout] = (acc * mask).astype(buf.dtype)
        else:
            o_ref[0, 0] = acc.astype(o_ref.dtype)     # lane-dense (padded Cout)


def run_conv_tower(inputs, conv_layers, pred_layer, *, compute_dtype, prec):
    """Shared stacked 3x3 conv(+ReLU) tower + 3x3 prediction conv applied to a
    list of per-level NHWC feature maps in ONE fused pallas_call (grid =
    (levels, batch)).  Returns per-level (N, g, g, Cout_pred) arrays."""
    grids = [int(x.shape[1]) for x in inputs]
    L, N = len(inputs), int(inputs[0].shape[0])
    gmax = max(grids)
    Hp = Wp = gmax + 2
    Pflat = Hp * Wp
    G = _round_up(Wp + 1, 8)
    cin0 = int(inputs[0].shape[-1])
    cin0_p = _round_up(cin0, 8)          # keep coord-augmented Cin sublane friendly

    canv, msk = [], []
    for x, g in zip(inputs, grids):
        canv.append(jnp.pad(
            x, ((0, 0), (1, Hp - 1 - g), (1, Wp - 1 - g), (0, cin0_p - cin0))
        ).reshape(N, Pflat, cin0_p))
        msk.append(jnp.pad(jnp.ones((g, g), jnp.float32),
                           ((1, Hp - 1 - g), (1, Wp - 1 - g))).reshape(Pflat, 1))
    x_all = jnp.stack(canv, 0).astype(compute_dtype)   # (L, N, Pflat, cin0_p)
    m_all = jnp.stack(msk, 0)                          # (L, Pflat, 1) f32

    layers = list(conv_layers) + [pred_layer]
    pred_cout = int(pred_layer[0].shape[-1])
    specs, ws, bs = [], [], []
    for li, (w, b) in enumerate(layers):
        cin, cout = int(w.shape[2]), int(w.shape[3])
        last = li == len(layers) - 1
        cin_p = cin0_p if li == 0 else cin
        cout_p = _round_up(cout, 128) if last else cout   # lane-dense pred store
        wpad = jnp.zeros((3, 3, cin_p, cout_p), jnp.float32)
        wpad = wpad.at[:, :, :cin, :cout].set(w)
        bpad = jnp.zeros((cout_p,), jnp.float32).at[:cout].set(b)
        ws.append(wpad.reshape(9, cin_p, cout_p).astype(compute_dtype))
        bs.append(bpad.reshape(1, cout_p))
        specs.append((cin_p, cout_p, not last))
    cbuf = max([cin0_p] + [s[1] for s in specs[:-1]])
    cout_last = specs[-1][1]

    in_specs = [
        pl.BlockSpec((1, 1, Pflat, cin0_p), lambda l, n: (l, n, 0, 0)),
        pl.BlockSpec((1, Pflat, 1), lambda l, n: (l, 0, 0)),
    ]
    operands = [x_all, m_all]
    for w_, b_ in zip(ws, bs):
        in_specs.append(pl.BlockSpec(w_.shape, lambda l, n: (0, 0, 0)))
        in_specs.append(pl.BlockSpec(b_.shape, lambda l, n: (0, 0)))
        operands += [w_, b_]

    out = pl.pallas_call(
        functools.partial(_tower_kernel, layer_specs=tuple(specs),
                          Pflat=Pflat, Wp=Wp, G=G, prec=prec),
        out_shape=jax.ShapeDtypeStruct((L, N, Pflat, cout_last), jnp.float32),
        grid=(L, N),
        in_specs=in_specs,
        out_specs=pl.BlockSpec((1, 1, Pflat, cout_last),
                               lambda l, n: (l, n, 0, 0)),
        scratch_shapes=[pltpu.VMEM((2 * G + Pflat, cbuf), compute_dtype)],
        compiler_params=pltpu.CompilerParams(
            dimension_semantics=("parallel", "parallel"),
            vmem_limit_bytes=_VMEM_LIMIT),
    )(*operands)

    out = out.reshape(L, N, Hp, Wp, cout_last)
    return [out[l, :, 1:g + 1, 1:g + 1, :pred_cout] for l, g in enumerate(grids)]


# ----------------------------------------------------------------------------
# Pallas kernel 2: row-tiled single 3x3 conv (tap accumulation).  The tile plus
# a one-row halo is assembled in a VMEM scratch; the halo rows arrive as tiny
# extra blocks of the padded input, so auto-pipelining stays intact.
# ----------------------------------------------------------------------------
def _conv3x3_kernel(body_ref, top_ref, bot_ref, w_ref, b_ref, o_ref, buf,
                    *, TH, Wp, relu, prec):
    G = _GUARD
    cin = buf.shape[-1]
    P = TH * Wp
    zg = jnp.zeros((G, cin), buf.dtype)
    buf[0:G] = zg
    buf[G + (TH + 2) * Wp:2 * G + (TH + 2) * Wp] = zg
    buf[G:G + Wp] = top_ref[0]                              # halo row above
    buf[G + Wp:G + Wp + P] = body_ref[0]                    # TH padded rows
    buf[G + (TH + 1) * Wp:G + (TH + 2) * Wp] = bot_ref[0]   # halo row below

    acc = None
    for t in range(9):
        ky, kx = divmod(t, 3)
        start = G + ky * Wp + kx - 1
        xs = buf[start:start + P, :]
        c = jnp.dot(xs, w_ref[t], preferred_element_type=jnp.float32,
                    precision=prec)
        acc = c if acc is None else acc + c
    acc = acc + b_ref[...]
    if relu:
        acc = jnp.maximum(acc, 0.0)
    o_ref[0] = acc.astype(o_ref.dtype)


def _pick_tile_rows(H, Wp, Cin, itemsize, budget=2 * 1024 * 1024):
    rows = budget // max(1, Wp * Cin * itemsize)
    th = max(8, min(H, int(rows)))
    if th < H:
        th = max(8, (th // 8) * 8)
    return th


def conv3x3(x, w, b, *, relu, compute_dtype, prec):
    """'same'-padding stride-1 3x3 conv + bias (+ReLU), NHWC, row-tiled."""
    N, H, W, Cin = (int(s) for s in x.shape)
    Cout = int(w.shape[-1])
    cin_p = _round_up(Cin, 8)
    Wp = _round_up(W + 2, 8)                 # padded, lane/sublane-friendly width
    TH = _pick_tile_rows(H, Wp, cin_p, jnp.dtype(compute_dtype).itemsize)
    n_tiles = -(-H // TH)
    H_pad = n_tiles * TH
    P = TH * Wp

    xp = jnp.pad(x, ((0, 0), (1, H_pad - H + 1), (1, Wp - W - 1),
                     (0, cin_p - Cin))).astype(compute_dtype)
    xpf = xp.reshape(N, (H_pad + 2) * Wp, cin_p)   # flattened padded rows
    body = xpf[:, Wp:Wp + H_pad * Wp]
    wpad = jnp.zeros((3, 3, cin_p, Cout), jnp.float32).at[:, :, :Cin, :].set(w)
    w2 = wpad.reshape(9, cin_p, Cout).astype(compute_dtype)
    b2 = b.reshape(1, Cout).astype(jnp.float32)

    out = pl.pallas_call(
        functools.partial(_conv3x3_kernel, TH=TH, Wp=Wp, relu=relu, prec=prec),
        out_shape=jax.ShapeDtypeStruct((N, H_pad * Wp, Cout), jnp.float32),
        grid=(N, n_tiles),
        in_specs=[
            pl.BlockSpec((1, P, cin_p), lambda n, i: (n, i, 0)),              # body rows
            pl.BlockSpec((1, Wp, cin_p), lambda n, i: (n, i * TH, 0)),        # top halo
            pl.BlockSpec((1, Wp, cin_p), lambda n, i: (n, i * TH + TH + 1, 0)),  # bottom halo
            pl.BlockSpec((9, cin_p, Cout), lambda n, i: (0, 0, 0)),
            pl.BlockSpec((1, Cout), lambda n, i: (0, 0)),
        ],
        out_specs=pl.BlockSpec((1, P, Cout), lambda n, i: (n, i, 0)),
        scratch_shapes=[pltpu.VMEM((2 * _GUARD + (TH + 2) * Wp, cin_p),
                                   compute_dtype)],
        compiler_params=pltpu.CompilerParams(
            dimension_semantics=("parallel", "parallel"),
            vmem_limit_bytes=_VMEM_LIMIT),
    )(body, xpf, xpf, w2, b2)
    out = out.reshape(N, H_pad, Wp, Cout)
    return out[:, :H, 1:W + 1, :]


# ----------------------------------------------------------------------------
# Pallas kernel 3: 1x1 conv = row-tiled matmul + bias (+ReLU), lane-dense Cout.
# ----------------------------------------------------------------------------
def _pointwise_kernel(x_ref, w_ref, b_ref, o_ref, *, relu, prec):
    acc = jnp.dot(x_ref[...], w_ref[...], preferred_element_type=jnp.float32,
                  precision=prec)
    acc = acc + b_ref[...]
    if relu:
        acc = jnp.maximum(acc, 0.0)
    o_ref[...] = acc.astype(o_ref.dtype)


def conv1x1(x, w, b, *, relu, compute_dtype, prec):
    N, H, W, Cin = (int(s) for s in x.shape)
    Cout = int(w.shape[-1])
    cout_p = _round_up(Cout, 128)
    M = N * H * W
    TM = min(512, _round_up(M, 8))
    M_pad = _round_up(M, TM)
    x2 = jnp.pad(x.reshape(M, Cin), ((0, M_pad - M), (0, 0))).astype(compute_dtype)
    w2 = jnp.zeros((Cin, cout_p), jnp.float32).at[:, :Cout].set(
        w.reshape(Cin, Cout)).astype(compute_dtype)
    b2 = jnp.zeros((1, cout_p), jnp.float32).at[:, :Cout].set(b.reshape(1, Cout))
    out = pl.pallas_call(
        functools.partial(_pointwise_kernel, relu=relu, prec=prec),
        out_shape=jax.ShapeDtypeStruct((M_pad, cout_p), jnp.float32),
        grid=(M_pad // TM,),
        in_specs=[
            pl.BlockSpec((TM, Cin), lambda i: (i, 0)),
            pl.BlockSpec((Cin, cout_p), lambda i: (0, 0)),
            pl.BlockSpec((1, cout_p), lambda i: (0, 0)),
        ],
        out_specs=pl.BlockSpec((TM, cout_p), lambda i: (i, 0)),
        compiler_params=pltpu.CompilerParams(
            dimension_semantics=("parallel",),
            vmem_limit_bytes=_VMEM_LIMIT),
    )(x2, w2, b2)
    return out[:M, :Cout].reshape(N, H, W, Cout)


# ----------------------------------------------------------------------------
# Plain-JAX glue: bilinear resize (align_corners=False), coord grid, points_nms
# ----------------------------------------------------------------------------
def _resize_indices(in_size, out_size):
    scale = in_size / out_size
    src = (jnp.arange(out_size, dtype=jnp.float32) + 0.5) * scale - 0.5
    src = jnp.maximum(src, 0.0)
    i0 = jnp.minimum(jnp.floor(src).astype(jnp.int32), in_size - 1)
    i1 = jnp.minimum(i0 + 1, in_size - 1)
    w1 = src - i0.astype(jnp.float32)
    return i0, i1, 1.0 - w1, w1


def bilinear_resize_nhwc(x, out_h, out_w):
    N, H, W, C = x.shape
    if (out_h, out_w) == (H, W):
        return x
    yi0, yi1, yw0, yw1 = _resize_indices(H, out_h)
    xi0, xi1, xw0, xw1 = _resize_indices(W, out_w)
    top = x[:, yi0] * yw0[None, :, None, None] + x[:, yi1] * yw1[None, :, None, None]
    return (top[:, :, xi0] * xw0[None, None, :, None]
            + top[:, :, xi1] * xw1[None, None, :, None])


def coord_grid(n, h, w):
    xg = jnp.linspace(-1.0, 1.0, w, dtype=jnp.float32)
    yg = jnp.linspace(-1.0, 1.0, h, dtype=jnp.float32)
    xx = jnp.broadcast_to(xg[None, :], (h, w))
    yy = jnp.broadcast_to(yg[:, None], (h, w))
    coord = jnp.stack([xx, yy], axis=-1)      # channel 0 = x, channel 1 = y
    return jnp.broadcast_to(coord[None], (n, h, w, 2))


def points_nms_nhwc(heat):
    """2x2 max-pool NMS (stride 1, pad 1, keep [:-1,:-1]) on sigmoid scores."""
    hp = jnp.pad(heat, ((0, 0), (1, 0), (1, 0), (0, 0)),
                 constant_values=-jnp.inf)
    hmax = lax.reduce_window(hp, -jnp.inf, lax.max, (1, 2, 2, 1),
                             (1, 1, 1, 1), 'VALID')
    keep = (hmax == heat).astype(heat.dtype)
    return heat * keep


# ----------------------------------------------------------------------------
# SOLOv2 head (forward pass only)
# ----------------------------------------------------------------------------
class SOLOv2HeadPallas:
    def __init__(self, num_classes, in_channels, seg_feat_channels=256,
                 stacked_convs=4, strides=(4, 8, 16, 32, 64), num_grids=None,
                 ins_out_channels=64, mask_feat_start_level=0,
                 mask_feat_end_level=3, compute_dtype=jnp.bfloat16, key=None):
        self.num_classes = num_classes
        self.cate_out_channels = num_classes - 1
        self.in_channels = in_channels
        self.seg_feat_channels = seg_feat_channels
        self.stacked_convs = stacked_convs
        self.strides = strides
        self.seg_num_grids = num_grids
        self.ins_out_channels = ins_out_channels
        self.kernel_out_channels = ins_out_channels * 1 * 1
        self.start = mask_feat_start_level
        self.end = mask_feat_end_level
        self.compute_dtype = compute_dtype
        self.prec = (jax.lax.Precision.HIGHEST
                     if jnp.dtype(compute_dtype) == jnp.dtype(jnp.float32)
                     else None)
        self.params = self._init_params(key if key is not None
                                        else jax.random.PRNGKey(42))

    # -------------------------- parameter init ------------------------------
    def _init_conv(self, key, k, cin, cout):
        kw, kb = jax.random.split(key)
        w = 0.1 * jax.random.normal(kw, (k, k, cin, cout), jnp.float32)
        b = 0.01 * jax.random.normal(kb, (cout,), jnp.float32)
        return w, b

    def _init_params(self, key):
        keys = iter(jax.random.split(key, 64))
        p = {}
        C, F, S = self.in_channels, self.seg_feat_channels, self.stacked_convs
        cins = [C] + [F] * (S - 1)
        p['cate_convs'] = [self._init_conv(next(keys), 3, c, F) for c in cins]
        p['solo_cate'] = self._init_conv(next(keys), 3, F, self.cate_out_channels)
        kins = [C + 2] + [F] * (S - 1)
        p['kernel_convs'] = [self._init_conv(next(keys), 3, c, F) for c in kins]
        p['solo_kernel'] = self._init_conv(next(keys), 3, F, self.kernel_out_channels)
        O = self.ins_out_channels
        fb = []
        n_levels = self.end - self.start + 1
        for i in range(n_levels):
            level = []
            if i == 0:
                level.append(self._init_conv(next(keys), 3, C, O))
            else:
                for j in range(i):
                    cin = ((C + 2 if i == n_levels - 1 else C) if j == 0 else O)
                    level.append(self._init_conv(next(keys), 3, cin, O))
            fb.append(level)
        p['fb_levels'] = fb
        p['fb_pred'] = self._init_conv(next(keys), 1, O, O)
        return p

    # ---------------------------- sub-branches ------------------------------
    def _feature_branch(self, inputs):
        cdt, prec = self.compute_dtype, self.prec
        w0, b0 = self.params['fb_levels'][0][0]
        feat = conv3x3(inputs[0], w0, b0, relu=True, compute_dtype=cdt, prec=prec)
        for i in range(1, len(inputs)):
            x = inputs[i]
            if i == len(inputs) - 1:
                n, h, w, _ = x.shape
                x = jnp.concatenate([x, coord_grid(n, h, w)], axis=-1)
            for (wt, bs) in self.params['fb_levels'][i]:
                x = conv3x3(x, wt, bs, relu=True, compute_dtype=cdt, prec=prec)
                n, h, w, _ = x.shape
                x = bilinear_resize_nhwc(x, h * 2, w * 2)
            feat = feat + x
        wp_, bp_ = self.params['fb_pred']
        return conv1x1(feat, wp_, bp_, relu=True, compute_dtype=cdt, prec=prec)

    def _split_feats(self, feats):
        f0 = feats[0]
        _, h0, w0, _ = f0.shape
        out0 = bilinear_resize_nhwc(f0, int(math.floor(h0 * 0.5)),
                                    int(math.floor(w0 * 0.5)))
        h3, w3 = feats[3].shape[1:3]
        out4 = bilinear_resize_nhwc(feats[4], h3, w3)
        return (out0, feats[1], feats[2], feats[3], out4)

    # ------------------------------ forward ---------------------------------
    def __call__(self, feats_nchw, eval=False):
        feats = [jnp.transpose(f, (0, 2, 3, 1)) for f in feats_nchw]  # NCHW->NHWC
        mask_feat = self._feature_branch(feats[self.start:self.end + 1])
        new_feats = self._split_feats(feats)

        # Build per-level, grid-resized inputs, then push all 5 levels through
        # each shared-weight tower in a single fused pallas_call per branch.
        cate_in, kern_in = [], []
        for idx, x in enumerate(new_feats):
            n, h, w, _ = x.shape
            g = self.seg_num_grids[idx]
            ikf = jnp.concatenate([x, coord_grid(n, h, w)], axis=-1)
            kern_in.append(bilinear_resize_nhwc(ikf, g, g))
            cate_in.append(bilinear_resize_nhwc(x, g, g))

        kernel_outs = run_conv_tower(kern_in, self.params['kernel_convs'],
                                     self.params['solo_kernel'],
                                     compute_dtype=self.compute_dtype,
                                     prec=self.prec)
        cate_outs = run_conv_tower(cate_in, self.params['cate_convs'],
                                   self.params['solo_cate'],
                                   compute_dtype=self.compute_dtype,
                                   prec=self.prec)

        cate_preds, kernel_preds = [], []
        for idx in range(len(new_feats)):
            cp, kp = cate_outs[idx], kernel_outs[idx]     # NHWC
            if eval:
                # canonical SOLOv2 CategoryBranch eval path: sigmoid + points_nms,
                # returned NHWC (matches torch .permute(0, 2, 3, 1)).
                cate_preds.append(points_nms_nhwc(jax.nn.sigmoid(cp)))
            else:
                cate_preds.append(jnp.transpose(cp, (0, 3, 1, 2)))
            kernel_preds.append(jnp.transpose(kp, (0, 3, 1, 2)))
        return cate_preds, kernel_preds, jnp.transpose(mask_feat, (0, 3, 1, 2))


# ----------------------------------------------------------------------------
if __name__ == "__main__":
    key = jax.random.PRNGKey(0)
    kc1, kc2, kc3, kc4, kc5, kc6, kc7, kfeat = jax.random.split(key, 8)
    hi = jax.lax.Precision.HIGHEST

    def _q(a):  # quantize to bf16-representable values (makes MXU products exact)
        return a.astype(jnp.bfloat16).astype(jnp.float32)

    # --- numerical self-checks of the Pallas conv kernels (f32 mode) --------
    xc = _q(jax.random.normal(kc1, (2, 9, 11, 5), jnp.float32))
    wc = _q(0.1 * jax.random.normal(kc2, (3, 3, 5, 7), jnp.float32))
    bc = 0.1 * jax.random.normal(kc3, (7,), jnp.float32)
    got = conv3x3(xc, wc, bc, relu=True, compute_dtype=jnp.float32, prec=None)
    ref = jnp.maximum(lax.conv_general_dilated(
        xc, wc, (1, 1), 'SAME', dimension_numbers=('NHWC', 'HWIO', 'NHWC'),
        precision=hi) + bc, 0.0)
    assert float(jnp.max(jnp.abs(got - ref))) < 1e-3, "conv3x3 mismatch"

    xp1 = _q(jax.random.normal(kc4, (2, 6, 10, 9), jnp.float32))
    wp1 = _q(0.1 * jax.random.normal(kc5, (1, 1, 9, 5), jnp.float32))
    bp1 = 0.1 * jax.random.normal(kc6, (5,), jnp.float32)
    got1 = conv1x1(xp1, wp1, bp1, relu=True, compute_dtype=jnp.float32, prec=None)
    ref1 = jnp.maximum(jnp.einsum('nhwc,cd->nhwd', xp1, wp1[0, 0],
                                  precision=hi) + bp1, 0.0)
    assert float(jnp.max(jnp.abs(got1 - ref1))) < 1e-3, "conv1x1 mismatch"

    # fused multi-level tower vs. a chain of reference convs (looser tol:
    # intermediate activations are not bf16-representable, so the MXU's
    # default input precision may differ slightly from the HIGHEST reference).
    tk = jax.random.split(kc7, 8)
    tw1 = _q(0.1 * jax.random.normal(tk[0], (3, 3, 5, 6), jnp.float32))
    tb1 = 0.1 * jax.random.normal(tk[1], (6,), jnp.float32)
    tw2 = _q(0.1 * jax.random.normal(tk[2], (3, 3, 6, 6), jnp.float32))
    tb2 = 0.1 * jax.random.normal(tk[3], (6,), jnp.float32)
    twp = _q(0.1 * jax.random.normal(tk[4], (3, 3, 6, 7), jnp.float32))
    tbp = 0.1 * jax.random.normal(tk[5], (7,), jnp.float32)
    tins = [_q(jax.random.normal(tk[6], (2, 7, 7, 5), jnp.float32)),
            _q(jax.random.normal(tk[7], (2, 5, 5, 5), jnp.float32))]
    touts = run_conv_tower(tins, [(tw1, tb1), (tw2, tb2)], (twp, tbp),
                           compute_dtype=jnp.float32, prec=None)
    for xin, tout in zip(tins, touts):
        h = xin
        for (tw, tb) in [(tw1, tb1), (tw2, tb2)]:
            h = jnp.maximum(lax.conv_general_dilated(
                h, tw, (1, 1), 'SAME',
                dimension_numbers=('NHWC', 'HWIO', 'NHWC'), precision=hi) + tb,
                0.0)
        pref = lax.conv_general_dilated(
            h, twp, (1, 1), 'SAME',
            dimension_numbers=('NHWC', 'HWIO', 'NHWC'), precision=hi) + tbp
        assert float(jnp.max(jnp.abs(tout - pref))) < 5e-2, "tower mismatch"

    # --- SOLOv2 head smoke test (bf16 MXU inputs, f32 accumulation) ---------
    N, C = 2, 4
    spatial = [32, 16, 8, 4, 2]                      # FPN levels P2..P6
    fkeys = jax.random.split(kfeat, len(spatial))
    feats = [jax.random.normal(fkeys[i], (N, C, s, s), jnp.float32)
             for i, s in enumerate(spatial)]

    head = SOLOv2HeadPallas(
        num_classes=3,            # -> cate_out_channels = 2
        in_channels=C,
        seg_feat_channels=8,
        stacked_convs=2,
        strides=(4, 8, 16, 32, 64),
        num_grids=(8, 6, 6, 4, 4),
        ins_out_channels=8,       # -> kernel_out_channels = 8
        mask_feat_start_level=0,
        mask_feat_end_level=3,
        compute_dtype=jnp.bfloat16,
        key=jax.random.PRNGKey(42),
    )

    cate_preds, kernel_preds, mask_feat_pred = head(feats, eval=False)
    jax.block_until_ready((cate_preds, kernel_preds, mask_feat_pred))

    # shape sanity checks
    assert mask_feat_pred.shape == (N, 8, 32, 32), mask_feat_pred.shape
    for idx, g in enumerate((8, 6, 6, 4, 4)):
        assert cate_preds[idx].shape == (N, 2, g, g), cate_preds[idx].shape
        assert kernel_preds[idx].shape == (N, 8, g, g), kernel_preds[idx].shape

    print("KERNEL_OK")
</pallas_src>

<mosaic_0001>
module attributes {stable_mosaic.version = 11 : i64} {
  func.func @_conv3x3_kernel(%arg0: i32, %arg1: i32, %arg2: memref<1x144x8xf32, #tpu.memory_space<vmem>>, %arg3: memref<1x16x8xf32, #tpu.memory_space<vmem>>, %arg4: memref<1x16x8xf32, #tpu.memory_space<vmem>>, %arg5: memref<9x8x7xf32, #tpu.memory_space<vmem>>, %arg6: memref<1x7xf32, #tpu.memory_space<vmem>>, %arg7: memref<1x144x7xf32, #tpu.memory_space<vmem>>, %arg8: memref<192x8xf32, #tpu.memory_space<vmem>>) attributes {dimension_semantics = [#tpu.dimension_semantics<parallel>, #tpu.dimension_semantics<parallel>], iteration_bounds = array<i64: 2, 1>, scalar_prefetch = 0 : i64, scratch_operands = 1 : i64, tpu.core_type = #tpu.core_type<tc>, window_params = [{transform_indices = @transform_0, window_bounds = array<i64: 1, 144, 8>}, {transform_indices = @transform_1, window_bounds = array<i64: 1, 16, 8>}, {transform_indices = @transform_2, window_bounds = array<i64: 1, 16, 8>}, {pipeline_mode = #tpu.pipeline_mode<synchronous>, transform_indices = @transform_3, window_bounds = array<i64: 9, 8, 7>}, {pipeline_mode = #tpu.pipeline_mode<synchronous>, transform_indices = @transform_4, window_bounds = array<i64: 1, 7>}, {transform_indices = @transform_5, window_bounds = array<i64: 1, 144, 7>}]} {
    %cst = arith.constant 0.000000e+00 : f32
    %0 = vector.broadcast %cst : f32 to vector<8x8xf32>
    %c0 = arith.constant 0 : index
    %c0_0 = arith.constant 0 : index
    %1 = vector.load %arg8[%c0, %c0_0] : memref<192x8xf32, #tpu.memory_space<vmem>>, vector<8x8xf32>
    tpu.vector_store %arg8[%c0, %c0_0], %0 {strides = array<i32>} : memref<192x8xf32, #tpu.memory_space<vmem>>, vector<8x8xf32>,
    %c184 = arith.constant 184 : index
    %c0_1 = arith.constant 0 : index
    %2 = vector.load %arg8[%c184, %c0_1] : memref<192x8xf32, #tpu.memory_space<vmem>>, vector<8x8xf32>
    tpu.vector_store %arg8[%c184, %c0_1], %0 {strides = array<i32>} : memref<192x8xf32, #tpu.memory_space<vmem>>, vector<8x8xf32>,
    %c0_2 = arith.constant 0 : index
    %c0_3 = arith.constant 0 : index
    %c0_4 = arith.constant 0 : index
    %3 = vector.load %arg3[%c0_2, %c0_3, %c0_4] : memref<1x16x8xf32, #tpu.memory_space<vmem>>, vector<1x16x8xf32>
    %4 = vector.shape_cast %3 : vector<1x16x8xf32> to vector<16x8xf32>
    %c8 = arith.constant 8 : index
    %c0_5 = arith.constant 0 : index
    %5 = vector.load %arg8[%c8, %c0_5] : memref<192x8xf32, #tpu.memory_space<vmem>>, vector<16x8xf32>
    tpu.vector_store %arg8[%c8, %c0_5], %4 {strides = array<i32>} : memref<192x8xf32, #tpu.memory_space<vmem>>, vector<16x8xf32>,
    %c0_6 = arith.constant 0 : index
    %c0_7 = arith.constant 0 : index
    %c0_8 = arith.constant 0 : index
    %6 = vector.load %arg2[%c0_6, %c0_7, %c0_8] : memref<1x144x8xf32, #tpu.memory_space<vmem>>, vector<1x144x8xf32>
    %7 = vector.shape_cast %6 : vector<1x144x8xf32> to vector<144x8xf32>
    %c24 = arith.constant 24 : index
    %c0_9 = arith.constant 0 : index
    %8 = vector.load %arg8[%c24, %c0_9] : memref<192x8xf32, #tpu.memory_space<vmem>>, vector<144x8xf32>
    tpu.vector_store %arg8[%c24, %c0_9], %7 {strides = array<i32>} : memref<192x8xf32, #tpu.memory_space<vmem>>, vector<144x8xf32>,
    %c0_10 = arith.constant 0 : index
    %c0_11 = arith.constant 0 : index
    %c0_12 = arith.constant 0 : index
    %9 = vector.load %arg4[%c0_10, %c0_11, %c0_12] : memref<1x16x8xf32, #tpu.memory_space<vmem>>, vector<1x16x8xf32>
    %10 = vector.shape_cast %9 : vector<1x16x8xf32> to vector<16x8xf32>
    %c168 = arith.constant 168 : index
    %c0_13 = arith.constant 0 : index
    %11 = vector.load %arg8[%c168, %c0_13] : memref<192x8xf32, #tpu.memory_space<vmem>>, vector<16x8xf32>
    tpu.vector_store %arg8[%c168, %c0_13], %10 {strides = array<i32>} : memref<192x8xf32, #tpu.memory_space<vmem>>, vector<16x8xf32>,
    %c7 = arith.constant 7 : index
    %c0_14 = arith.constant 0 : index
    %12 = vector.load %arg8[%c7, %c0_14] : memref<192x8xf32, #tpu.memory_space<vmem>>, vector<144x8xf32>
    %c0_15 = arith.constant 0 : index
    %c0_16 = arith.constant 0 : index
    %c0_17 = arith.constant 0 : index
    %13 = vector.load %arg5[%c0_15, %c0_16, %c0_17] : memref<9x8x7xf32, #tpu.memory_space<vmem>>, vector<1x8x7xf32>
    %14 = vector.shape_cast %13 : vector<1x8x7xf32> to vector<8x7xf32>
    %cst_18 = arith.constant dense<0.000000e+00> : vector<144x7xf32>
    %15 = tpu.matmul %12, %14, %cst_18 {dimension_numbers = #tpu.dot_dimension_numbers<[1], [0], [0], [1], [0, 0, 1, 1], [], []>} : vector<144x8xf32>, vector<8x7xf32>, vector<144x7xf32> -> vector<144x7xf32>
    %c8_19 = arith.constant 8 : index
    %c0_20 = arith.constant 0 : index
    %16 = vector.load %arg8[%c8_19, %c0_20] : memref<192x8xf32, #tpu.memory_space<vmem>>, vector<144x8xf32>
    %c1 = arith.constant 1 : index
    %c0_21 = arith.constant 0 : index
    %c0_22 = arith.constant 0 : index
    %17 = vector.load %arg5[%c1, %c0_21, %c0_22] : memref<9x8x7xf32, #tpu.memory_space<vmem>>, vector<1x8x7xf32>
    %18 = vector.shape_cast %17 : vector<1x8x7xf32> to vector<8x7xf32>
    %cst_23 = arith.constant dense<0.000000e+00> : vector<144x7xf32>
    %19 = tpu.matmul %16, %18, %cst_23 {dimension_numbers = #tpu.dot_dimension_numbers<[1], [0], [0], [1], [0, 0, 1, 1], [], []>} : vector<144x8xf32>, vector<8x7xf32>, vector<144x7xf32> -> vector<144x7xf32>
    %20 = arith.addf %15, %19 : vector<144x7xf32>
    %c9 = arith.constant 9 : index
    %c0_24 = arith.constant 0 : index
    %21 = vector.load %arg8[%c9, %c0_24] : memref<192x8xf32, #tpu.memory_space<vmem>>, vector<144x8xf32>
    %c2 = arith.constant 2 : index
    %c0_25 = arith.constant 0 : index
    %c0_26 = arith.constant 0 : index
    %22 = vector.load %arg5[%c2, %c0_25, %c0_26] : memref<9x8x7xf32, #tpu.memory_space<vmem>>, vector<1x8x7xf32>
    %23 = vector.shape_cast %22 : vector<1x8x7xf32> to vector<8x7xf32>
    %cst_27 = arith.constant dense<0.000000e+00> : vector<144x7xf32>
    %24 = tpu.matmul %21, %23, %cst_27 {dimension_numbers = #tpu.dot_dimension_numbers<[1], [0], [0], [1], [0, 0, 1, 1], [], []>} : vector<144x8xf32>, vector<8x7xf32>, vector<144x7xf32> -> vector<144x7xf32>
    %25 = arith.addf %20, %24 : vector<144x7xf32>
    %c23 = arith.constant 23 : index
    %c0_28 = arith.constant 0 : index
    %26 = vector.load %arg8[%c23, %c0_28] : memref<192x8xf32, #tpu.memory_space<vmem>>, vector<144x8xf32>
    %c3 = arith.constant 3 : index
    %c0_29 = arith.constant 0 : index
    %c0_30 = arith.constant 0 : index
    %27 = vector.load %arg5[%c3, %c0_29, %c0_30] : memref<9x8x7xf32, #tpu.memory_space<vmem>>, vector<1x8x7xf32>
    %28 = vector.shape_cast %27 : vector<1x8x7xf32> to vector<8x7xf32>
    %cst_31 = arith.constant dense<0.000000e+00> : vector<144x7xf32>
    %29 = tpu.matmul %26, %28, %cst_31 {dimension_numbers = #tpu.dot_dimension_numbers<[1], [0], [0], [1], [0, 0, 1, 1], [], []>} : vector<144x8xf32>, vector<8x7xf32>, vector<144x7xf32> -> vector<144x7xf32>
    %30 = arith.addf %25, %29 : vector<144x7xf32>
    %c24_32 = arith.constant 24 : index
    %c0_33 = arith.constant 0 : index
    %31 = vector.load %arg8[%c24_32, %c0_33] : memref<192x8xf32, #tpu.memory_space<vmem>>, vector<144x8xf32>
    %c4 = arith.constant 4 : index
    %c0_34 = arith.constant 0 : index
    %c0_35 = arith.constant 0 : index
    %32 = vector.load %arg5[%c4, %c0_34, %c0_35] : memref<9x8x7xf32, #tpu.memory_space<vmem>>, vector<1x8x7xf32>
    %33 = vector.shape_cast %32 : vector<1x8x7xf32> to vector<8x7xf32>
    %cst_36 = arith.constant dense<0.000000e+00> : vector<144x7xf32>
    %34 = tpu.matmul %31, %33, %cst_36 {dimension_numbers = #tpu.dot_dimension_numbers<[1], [0], [0], [1], [0, 0, 1, 1], [], []>} : vector<144x8xf32>, vector<8x7xf32>, vector<144x7xf32> -> vector<144x7xf32>
    %35 = arith.addf %30, %34 : vector<144x7xf32>
    %c25 = arith.constant 25 : index
    %c0_37 = arith.constant 0 : index
    %36 = vector.load %arg8[%c25, %c0_37] : memref<192x8xf32, #tpu.memory_space<vmem>>, vector<144x8xf32>
    %c5 = arith.constant 5 : index
    %c0_38 = arith.constant 0 : index
    %c0_39 = arith.constant 0 : index
    %37 = vector.load %arg5[%c5, %c0_38, %c0_39] : memref<9x8x7xf32, #tpu.memory_space<vmem>>, vector<1x8x7xf32>
    %38 = vector.shape_cast %37 : vector<1x8x7xf32> to vector<8x7xf32>
    %cst_40 = arith.constant dense<0.000000e+00> : vector<144x7xf32>
    %39 = tpu.matmul %36, %38, %cst_40 {dimension_numbers = #tpu.dot_dimension_numbers<[1], [0], [0], [1], [0, 0, 1, 1], [], []>} : vector<144x8xf32>, vector<8x7xf32>, vector<144x7xf32> -> vector<144x7xf32>
    %40 = arith.addf %35, %39 : vector<144x7xf32>
    %c39 = arith.constant 39 : index
    %c0_41 = arith.constant 0 : index
    %41 = vector.load %arg8[%c39, %c0_41] : memref<192x8xf32, #tpu.memory_space<vmem>>, vector<144x8xf32>
    %c6 = arith.constant 6 : index
    %c0_42 = arith.constant 0 : index
    %c0_43 = arith.constant 0 : index
    %42 = vector.load %arg5[%c6, %c0_42, %c0_43] : memref<9x8x7xf32, #tpu.memory_space<vmem>>, vector<1x8x7xf32>
    %43 = vector.shape_cast %42 : vector<1x8x7xf32> to vector<8x7xf32>
    %cst_44 = arith.constant dense<0.000000e+00> : vector<144x7xf32>
    %44 = tpu.matmul %41, %43, %cst_44 {dimension_numbers = #tpu.dot_dimension_numbers<[1], [0], [0], [1], [0, 0, 1, 1], [], []>} : vector<144x8xf32>, vector<8x7xf32>, vector<144x7xf32> -> vector<144x7xf32>
    %45 = arith.addf %40, %44 : vector<144x7xf32>
    %c40 = arith.constant 40 : index
    %c0_45 = arith.constant 0 : index
    %46 = vector.load %arg8[%c40, %c0_45] : memref<192x8xf32, #tpu.memory_space<vmem>>, vector<144x8xf32>
    %c7_46 = arith.constant 7 : index
    %c0_47 = arith.constant 0 : index
    %c0_48 = arith.constant 0 : index
    %47 = vector.load %arg5[%c7_46, %c0_47, %c0_48] : memref<9x8x7xf32, #tpu.memory_space<vmem>>, vector<1x8x7xf32>
    %48 = vector.shape_cast %47 : vector<1x8x7xf32> to vector<8x7xf32>
    %cst_49 = arith.constant dense<0.000000e+00> : vector<144x7xf32>
    %49 = tpu.matmul %46, %48, %cst_49 {dimension_numbers = #tpu.dot_dimension_numbers<[1], [0], [0], [1], [0, 0, 1, 1], [], []>} : vector<144x8xf32>, vector<8x7xf32>, vector<144x7xf32> -> vector<144x7xf32>
    %50 = arith.addf %45, %49 : vector<144x7xf32>
    %c41 = arith.constant 41 : index
    %c0_50 = arith.constant 0 : index
    %51 = vector.load %arg8[%c41, %c0_50] : memref<192x8xf32, #tpu.memory_space<vmem>>, vector<144x8xf32>
    %c8_51 = arith.constant 8 : index
    %c0_52 = arith.constant 0 : index
    %c0_53 = arith.constant 0 : index
    %52 = vector.load %arg5[%c8_51, %c0_52, %c0_53] : memref<9x8x7xf32, #tpu.memory_space<vmem>>, vector<1x8x7xf32>
    %53 = vector.shape_cast %52 : vector<1x8x7xf32> to vector<8x7xf32>
    %cst_54 = arith.constant dense<0.000000e+00> : vector<144x7xf32>
    %54 = tpu.matmul %51, %53, %cst_54 {dimension_numbers = #tpu.dot_dimension_numbers<[1], [0], [0], [1], [0, 0, 1, 1], [], []>} : vector<144x8xf32>, vector<8x7xf32>, vector<144x7xf32> -> vector<144x7xf32>
    %55 = arith.addf %50, %54 : vector<144x7xf32>
    %c0_55 = arith.constant 0 : index
    %c0_56 = arith.constant 0 : index
    %56 = vector.load %arg6[%c0_55, %c0_56] : memref<1x7xf32, #tpu.memory_space<vmem>>, vector<1x7xf32>
    %57 = vector.broadcast %56 : vector<1x7xf32> to vector<144x7xf32>
    %58 = arith.addf %55, %57 : vector<144x7xf32>
    %cst_57 = arith.constant 0.000000e+00 : f32
    %59 = vector.broadcast %cst_57 : f32 to vector<144x7xf32>
    %60 = arith.maximumf %58, %59 : vector<144x7xf32>
    %c0_58 = arith.constant 0 : index
    %c0_59 = arith.constant 0 : index
    %c0_60 = arith.constant 0 : index
    %61 = vector.load %arg7[%c0_58, %c0_59, %c0_60] : memref<1x144x7xf32, #tpu.memory_space<vmem>>, vector<1x144x7xf32>
    %62 = vector.shape_cast %61 : vector<1x144x7xf32> to vector<144x7xf32>
    %63 = vector.shape_cast %60 : vector<144x7xf32> to vector<1x144x7xf32>
    tpu.vector_store %arg7[%c0_58, %c0_59, %c0_60], %63 {strides = array<i32>} : memref<1x144x7xf32, #tpu.memory_space<vmem>>, vector<1x144x7xf32>,
    return
  }
  func.func @transform_0(%arg0: i32, %arg1: i32) -> (i32, i32, i32) {
    %c0_i32 = arith.constant 0 : i32
    %c0_i32_0 = arith.constant 0 : i32
    return %arg0, %arg1, %c0_i32 : i32, i32, i32
  }
  func.func @transform_1(%arg0: i32, %arg1: i32) -> (i32, i32, i32) {
    %c9_i32 = arith.constant 9 : i32
    %0 = arith.muli %arg1, %c9_i32 : i32
    %c0_i32 = arith.constant 0 : i32
    %c0_i32_0 = arith.constant 0 : i32
    return %arg0, %0, %c0_i32 : i32, i32, i32
  }
  func.func @transform_2(%arg0: i32, %arg1: i32) -> (i32, i32, i32) {
    %c9_i32 = arith.constant 9 : i32
    %0 = arith.muli %arg1, %c9_i32 : i32
    %c9_i32_0 = arith.constant 9 : i32
    %1 = arith.addi %0, %c9_i32_0 : i32
    %c1_i32 = arith.constant 1 : i32
    %2 = arith.addi %1, %c1_i32 : i32
    %c0_i32 = arith.constant 0 : i32
    %c0_i32_1 = arith.constant 0 : i32
    return %arg0, %2, %c0_i32 : i32, i32, i32
  }
  func.func @transform_3(%arg0: i32, %arg1: i32) -> (i32, i32, i32) {
    %c0_i32 = arith.constant 0 : i32
    %c0_i32_0 = arith.constant 0 : i32
    %c0_i32_1 = arith.constant 0 : i32
    %c0_i32_2 = arith.constant 0 : i32
    return %c0_i32, %c0_i32_0, %c0_i32_1 : i32, i32, i32
  }
  func.func @transform_4(%arg0: i32, %arg1: i32) -> (i32, i32) {
    %c0_i32 = arith.constant 0 : i32
    %c0_i32_0 = arith.constant 0 : i32
    %c0_i32_1 = arith.constant 0 : i32
    return %c0_i32, %c0_i32_0 : i32, i32
  }
  func.func @transform_5(%arg0: i32, %arg1: i32) -> (i32, i32, i32) {
    %c0_i32 = arith.constant 0 : i32
    %c0_i32_0 = arith.constant 0 : i32
    return %arg0, %arg1, %c0_i32 : i32, i32, i32
  }
}

</mosaic_0001>

<llo_original>
// kernel: tpu_custom_call.1
$region0: #{tpu_custom_call.1}
  #allocation0 [shape = 'u32[]', space=smem, size = 0x4, offset = 0x4, fixed_abs, tag = 'smem constant byte address 0x4 - core index']
  #allocation1 [shape = 'u32[144,128]{1,0:T(1,128)}', space=vmem, size = 0x12000, scoped, tag = 'internal scratch']
  #allocation2 [shape = 'f32[192,8]{1,0:T(8,128)}', space=vmem, size = 0x18000, scoped, tag = 'scratch operand']
  %s0 = inlined_call_operand.vmem [shape: f32[2,144,8], index: 0, kind: input, shape index: {}]
  %s1 = inlined_call_operand.vmem [shape: f32[2,176,8], index: 1, kind: input, shape index: {}]
  %s2 = inlined_call_operand.vmem [shape: f32[2,176,8], index: 2, kind: input, shape index: {}]
  %s3 = inlined_call_operand.vmem [shape: f32[9,8,7], index: 3, kind: input, shape index: {}]
  %s4 = inlined_call_operand.vmem [shape: f32[1,7], index: 4, kind: input, shape index: {}]
  %s5 = inlined_call_operand.vmem [shape: f32[2,144,7], index: 5, kind: output, shape index: {}]
  %s6 = sld [smem:[#allocation0]]
  $region53: #{tpu_custom_call.1} parent=0
    _
  %s8 = ssub.s32 1, %s6
  %s9 = scalar_select 0, %s8, %s6
  loop: start=0, step=1, limit=4
  $region2: #{tpu_custom_call.1} parent=0 // loop_pre_header
    _
  $region3: #{tpu_custom_call.1} parent=0 // loop_header
    %s11 = sphi 0, %s15
    %p12 = scmp.ge.s32.totalorder %s11, 4
    %s18 = sphi 0, %s30
    %s19 = sphi 0, %s26
    %s20 = sphi 0, %s18
    %s21 = sphi 0, %s19
    %s22 = sphi 0, %s20
    %s23 = sphi 0, %s21
    %s35 = sphi 0, %s37
    %s38 = sphi 0, %s35
    %s39 = sphi 0, %s38
    %s55 = sphi 0, %s39
    %s65 = sphi 0, %s67
    %s68 = sphi 0, %s65
    %s69 = sphi 0, %s68
    %s85 = sphi 0, %s69
    %s97 = sphi 0, %s99
    %s100 = sphi 0, %s97
    %s101 = sphi 0, %s100
    %s117 = sphi 0, %s101
    %s121 = sphi 0, %s121
    %s123 = sphi 0, %s121
    %s124 = sphi 0, %s123
    %s138 = sphi 0, %s124
    %s142 = sphi 0, %s142
    %s144 = sphi 0, %s142
    %s145 = sphi 0, %s144
    %s159 = sphi 0, %s145
    %s167 = sphi 0, %s169
    %s170 = sphi 0, %s167
    %s171 = sphi 0, %s170
    %s187 = sphi 0, %s171
  $region4: #{tpu_custom_call.1} parent=0 // loop_header_branch
    %14 = sbr.rel (%p12) target = $region8
  $region5: #{tpu_custom_call.1} parent=0 // loop_body
    %s16 = ssub.s32 %s11, 1
    %s17 = ssub.s32 %s11, 2
    %s24 = sadd.s32 1, %s19
    %p25 = scmp.ge.s32.totalorder %s24, 1
    %s26 = scalar_select %p25, 0, %s24
    %s27 = sadd.s32 1, %s18
    %s28 = scalar_select %p25, %s27, %s18
    %p29 = scmp.ge.s32.totalorder %s28, 2
    %s30 = scalar_select %p29, 0, %s28
    %s31 = ssub.s32 %s18, %s30
    %s32 = ssub.s32 %s19, %s26
    %s33 = sor.u32 %s31, %s32
    %p34 = scmp.eq.s32.totalorder %s33, 0
    %s36 = sadd.s32 %s35, 1
    %s37 = scalar_select %p34, %s35, %s36
    %p40 = pneg %p34
    %p41 = scmp.eq.s32.totalorder %s11, 1
    %p42 = por %p40, %p41
    %p43 = scmp.ne.s32.totalorder %s35, %s38
    %p44 = scmp.eq.s32.totalorder %s11, 0
    %p45 = por %p43, %p44
    %p46 = scmp.ne.s32.totalorder %s35, %s38
    %p47 = scmp.eq.s32.totalorder %s16, 1
    %p48 = por %p46, %p47
    %p49 = scmp.ne.s32.totalorder %s38, %s39
    %p50 = scmp.eq.s32.totalorder %s16, 0
    %p51 = por %p49, %p50
    %p52 = scmp.ne.s32.totalorder %s38, %s39
    %p53 = scmp.eq.s32.totalorder %s17, 1
    %p54 = por %p52, %p53
    %p56 = scmp.ne.s32.totalorder %s39, %s55
    %p57 = scmp.eq.s32.totalorder %s17, 0
    %p58 = por %p56, %p57
    %s59 = smul.u32 %s19, 9
    %s60 = smul.u32 %s26, 9
    %s61 = ssub.s32 %s18, %s30
    %s62 = ssub.s32 %s59, %s60
    %s63 = sor.u32 %s61, %s62
    %p64 = scmp.eq.s32.totalorder %s63, 0
    %s66 = sadd.s32 %s65, 1
    %s67 = scalar_select %p64, %s65, %s66
    %p70 = pneg %p64
    %p71 = scmp.eq.s32.totalorder %s11, 1
    %p72 = por %p70, %p71
    %p73 = scmp.ne.s32.totalorder %s65, %s68
    %p74 = scmp.eq.s32.totalorder %s11, 0
    %p75 = por %p73, %p74
    %p76 = scmp.ne.s32.totalorder %s65, %s68
    %p77 = scmp.eq.s32.totalorder %s16, 1
    %p78 = por %p76, %p77
    %p79 = scmp.ne.s32.totalorder %s68, %s69
    %p80 = scmp.eq.s32.totalorder %s16, 0
    %p81 = por %p79, %p80
    %p82 = scmp.ne.s32.totalorder %s68, %s69
    %p83 = scmp.eq.s32.totalorder %s17, 1
    %p84 = por %p82, %p83
    %p86 = scmp.ne.s32.totalorder %s69, %s85
    %p87 = scmp.eq.s32.totalorder %s17, 0
    %p88 = por %p86, %p87
    %s89 = smul.u32 %s19, 9
    %s90 = sadd.s32 %s89, 10
    %s91 = smul.u32 %s26, 9
    %s92 = sadd.s32 %s91, 10
    %s93 = ssub.s32 %s18, %s30
    %s94 = ssub.s32 %s90, %s92
    %s95 = sor.u32 %s93, %s94
    %p96 = scmp.eq.s32.totalorder %s95, 0
    %s98 = sadd.s32 %s97, 1
    %s99 = scalar_select %p96, %s97, %s98
    %p102 = pneg %p96
    %p103 = scmp.eq.s32.totalorder %s11, 1
    %p104 = por %p102, %p103
    %p105 = scmp.ne.s32.totalorder %s97, %s100
    %p106 = scmp.eq.s32.totalorder %s11, 0
    %p107 = por %p105, %p106
    %p108 = scmp.ne.s32.totalorder %s97, %s100
    %p109 = scmp.eq.s32.totalorder %s16, 1
    %p110 = por %p108, %p109
    %p111 = scmp.ne.s32.totalorder %s100, %s101
    %p112 = scmp.eq.s32.totalorder %s16, 0
    %p113 = por %p111, %p112
    %p114 = scmp.ne.s32.totalorder %s100, %s101
    %p115 = scmp.eq.s32.totalorder %s17, 1
    %p116 = por %p114, %p115
    %p118 = scmp.ne.s32.totalorder %s101, %s117
    %p119 = scmp.eq.s32.totalorder %s17, 0
    %p120 = por %p118, %p119
    %s122 = sadd.s32 %s121, 1
    %p125 = scmp.eq.s32.totalorder %s11, 1
    %p126 = scmp.ne.s32.totalorder %s121, %s123
    %p127 = scmp.eq.s32.totalorder %s11, 0
    %p128 = por %p126, %p127
    %p129 = scmp.ne.s32.totalorder %s121, %s123
    %p130 = scmp.eq.s32.totalorder %s16, 1
    %p131 = por %p129, %p130
    %p132 = scmp.ne.s32.totalorder %s123, %s124
    %p133 = scmp.eq.s32.totalorder %s16, 0
    %p134 = por %p132, %p133
    %p135 = scmp.ne.s32.totalorder %s123, %s124
    %p136 = scmp.eq.s32.totalorder %s17, 1
    %p137 = por %p135, %p136
    %p139 = scmp.ne.s32.totalorder %s124, %s138
    %p140 = scmp.eq.s32.totalorder %s17, 0
    %p141 = por %p139, %p140
    %s143 = sadd.s32 %s142, 1
    %p146 = scmp.eq.s32.totalorder %s11, 1
    %p147 = scmp.ne.s32.totalorder %s142, %s144
    %p148 = scmp.eq.s32.totalorder %s11, 0
    %p149 = por %p147, %p148
    %p150 = scmp.ne.s32.totalorder %s142, %s144
    %p151 = scmp.eq.s32.totalorder %s16, 1
    %p152 = por %p150, %p151
    %p153 = scmp.ne.s32.totalorder %s144, %s145
    %p154 = scmp.eq.s32.totalorder %s16, 0
    %p155 = por %p153, %p154
    %p156 = scmp.ne.s32.totalorder %s144, %s145
    %p157 = scmp.eq.s32.totalorder %s17, 1
    %p158 = por %p156, %p157
    %p160 = scmp.ne.s32.totalorder %s145, %s159
    %p161 = scmp.eq.s32.totalorder %s17, 0
    %p162 = por %p160, %p161
    %s163 = ssub.s32 %s18, %s30
    %s164 = ssub.s32 %s19, %s26
    %s165 = sor.u32 %s163, %s164
    %p166 = scmp.eq.s32.totalorder %s165, 0
    %s168 = sadd.s32 %s167, 1
    %s169 = scalar_select %p166, %s167, %s168
    %p172 = pneg %p166
    %p173 = scmp.eq.s32.totalorder %s11, 1
    %p174 = por %p172, %p173
    %p175 = scmp.ne.s32.totalorder %s167, %s170
    %p176 = scmp.eq.s32.totalorder %s11, 0
    %p177 = por %p175, %p176
    %p178 = scmp.ne.s32.totalorder %s167, %s170
    %p179 = scmp.eq.s32.totalorder %s16, 1
    %p180 = por %p178, %p179
    %p181 = scmp.ne.s32.totalorder %s170, %s171
    %p182 = scmp.eq.s32.totalorder %s16, 0
    %p183 = por %p181, %p182
    %p184 = scmp.ne.s32.totalorder %s170, %s171
    %p185 = scmp.eq.s32.totalorder %s17, 1
    %p186 = por %p184, %p185
    %p188 = scmp.ne.s32.totalorder %s171, %s187
    %p189 = scmp.eq.s32.totalorder %s17, 0
    %p190 = por %p188, %p189
    %p191 = scmp.le.s32.totalorder 1, %s11
    %p192 = scmp.lt.s32.totalorder %s11, 3
    %p193 = pnand %p191, %p192
    %p194 = pneg %p193
    // Predicated region
    $region9: #{tpu_custom_call.1} parent=5 // pred_check
      _
    $region10: #{tpu_custom_call.1} parent=5 // pred_check_branch
      %196 = sbr.rel (%p193) target = $region12
    $region11: #{tpu_custom_call.1} parent=5 // pred_region
      %s197 = ssub.s32 %s11, 1
      // Predicated region
      $region13: #{tpu_custom_call.1} parent=11 // pred_check
        %p198 = pneg %p134
      $region14: #{tpu_custom_call.1} parent=11 // pred_check_branch
        %200 = sbr.rel (%p198) target = $region16
      $region15: #{tpu_custom_call.1} parent=11 // pred_region
        _
      $region16: #{tpu_custom_call.1} parent=11 // pred_fallthru
        _
      // Predicated region
      $region17: #{tpu_custom_call.1} parent=11 // pred_check
        %p201 = pneg %p155
      $region18: #{tpu_custom_call.1} parent=11 // pred_check_branch
        %203 = sbr.rel (%p201) target = $region20
      $region19: #{tpu_custom_call.1} parent=11 // pred_region
        _
      $region20: #{tpu_custom_call.1} parent=11 // pred_fallthru
        _
    $region12: #{tpu_custom_call.1} parent=5 // pred_fallthru
      _
    %p204 = scmp.lt.s32.totalorder %s11, 2
    // Predicated region
    $region21: #{tpu_custom_call.1} parent=5 // pred_check
      %p205 = pneg %p204
    $region22: #{tpu_custom_call.1} parent=5 // pred_check_branch
      %207 = sbr.rel (%p205) target = $region24
    $region23: #{tpu_custom_call.1} parent=5 // pred_region
      // Predicated region
      $region25: #{tpu_custom_call.1} parent=23 // pred_check
        %p208 = pneg %p45
      $region26: #{tpu_custom_call.1} parent=23 // pred_check_branch
        %210 = sbr.rel (%p208) target = $region28
      $region27: #{tpu_custom_call.1} parent=23 // pred_region
        %s211 = smul.u32 18, %s19
        %p212 = scmp.lt.s32.totalorder %s18, 1
        %s213 = scalar_select %p212, %s18, 1
        %p214 = scmp.lt.s32.totalorder %s211, 17
        %s215 = scalar_select %p214, %s211, 17
        %s216 = smul.addr %s213, 18
        %s217 = sadd.s32 %s215, %s216
        %s218 = smul.addr %s217, 8
        %s219 = scalar_lea.vmem %s0, %s218
        %s220 = smul.u32 18, %s19
      $region28: #{tpu_custom_call.1} parent=23 // pred_fallthru
        _
      // Predicated region
      $region29: #{tpu_custom_call.1} parent=23 // pred_check
        %p221 = pneg %p75
      $region30: #{tpu_custom_call.1} parent=23 // pred_check_branch
        %223 = sbr.rel (%p221) target = $region32
      $region31: #{tpu_custom_call.1} parent=23 // pred_region
        %s224 = smul.u32 %s19, 9
        %s225 = smul.u32 2, %s224
        %p226 = scmp.lt.s32.totalorder %s18, 1
        %s227 = scalar_select %p226, %s18, 1
        %p228 = scmp.lt.s32.totalorder %s225, 21
        %s229 = scalar_select %p228, %s225, 21
        %s230 = smul.addr %s227, 22
        %s231 = sadd.s32 %s229, %s230
        %s232 = smul.addr %s231, 8
        %s233 = scalar_lea.vmem %s1, %s232
        %s234 = smul.u32 %s19, 9
        %s235 = smul.u32 2, %s234
      $region32: #{tpu_custom_call.1} parent=23 // pred_fallthru
        _
      // Predicated region
      $region33: #{tpu_custom_call.1} parent=23 // pred_check
        %p236 = pneg %p107
      $region34: #{tpu_custom_call.1} parent=23 // pred_check_branch
        %238 = sbr.rel (%p236) target = $region36
      $region35: #{tpu_custom_call.1} parent=23 // pred_region
        %s239 = smul.u32 %s19, 9
        %s240 = sadd.s32 %s239, 10
        %s241 = smul.u32 2, %s240
        %p242 = scmp.lt.s32.totalorder %s18, 1
        %s243 = scalar_select %p242, %s18, 1
        %p244 = scmp.lt.s32.totalorder %s241, 21
        %s245 = scalar_select %p244, %s241, 21
        %s246 = smul.addr %s243, 22
        %s247 = sadd.s32 %s245, %s246
        %s248 = smul.addr %s247, 8
        %s249 = scalar_lea.vmem %s2, %s248
        %s250 = smul.u32 %s19, 9
        %s251 = sadd.s32 %s250, 10
        %s252 = smul.u32 2, %s251
      $region36: #{tpu_custom_call.1} parent=23 // pred_fallthru
        _
    $region24: #{tpu_custom_call.1} parent=5 // pred_fallthru
      _
    %p253 = scmp.le.s32.totalorder 1, %s11
    %p254 = scmp.lt.s32.totalorder %s11, 3
    %p255 = pnand %p253, %p254
    %p256 = pneg %p255
    // Predicated region
    $region37: #{tpu_custom_call.1} parent=5 // pred_check
      _
    $region38: #{tpu_custom_call.1} parent=5 // pred_check_branch
      %258 = sbr.rel (%p255) target = $region40
    $region39: #{tpu_custom_call.1} parent=5 // pred_region
      %s259 = ssub.s32 %s11, 1
      %s260 = smul.u32 18, %s21
      %p261 = scmp.lt.s32.totalorder %s20, 1
      %s262 = scalar_select %p261, %s20, 1
      %p263 = scmp.lt.s32.totalorder %s260, 17
      %s264 = scalar_select %p263, %s260, 17
      %s265 = smul.addr %s262, 18
      %s266 = sadd.s32 %s264, %s265
      %s267 = smul.addr %s266, 8
      %s268 = scalar_lea.vmem %s0, %s267
      %p269 = pneg %p51
      %p270 = pneg %p48
      %s271 = smul.u32 %s21, 9
      %s272 = smul.u32 2, %s271
      %p273 = scmp.lt.s32.totalorder %s20, 1
      %s274 = scalar_select %p273, %s20, 1
      %p275 = scmp.lt.s32.totalorder %s272, 21
      %s276 = scalar_select %p275, %s272, 21
      %s277 = smul.addr %s274, 22
      %s278 = sadd.s32 %s276, %s277
      %s279 = smul.addr %s278, 8
      %s280 = scalar_lea.vmem %s1, %s279
      %p281 = pneg %p81
      %p282 = pneg %p78
      %s283 = smul.u32 %s21, 9
      %s284 = sadd.s32 %s283, 10
      %s285 = smul.u32 2, %s284
      %p286 = scmp.lt.s32.totalorder %s20, 1
      %s287 = scalar_select %p286, %s20, 1
      %p288 = scmp.lt.s32.totalorder %s285, 21
      %s289 = scalar_select %p288, %s285, 21
      %s290 = smul.addr %s287, 22
      %s291 = sadd.s32 %s289, %s290
      %s292 = smul.addr %s291, 8
      %s293 = scalar_lea.vmem %s2, %s292
      %p294 = pneg %p113
      %p295 = pneg %p110
      %p296 = pneg %p134
      %p297 = pneg %p131
      %p298 = pneg %p155
      %p299 = pneg %p152
      %p300 = pneg %p183
      %p301 = pneg %p180
      %s302 = smul.u32 18, %s21
      %p303 = scmp.lt.s32.totalorder %s20, 1
      %s304 = scalar_select %p303, %s20, 1
      %p305 = scmp.lt.s32.totalorder %s302, 17
      %s306 = scalar_select %p305, %s302, 17
      %s307 = smul.addr %s304, 18
      %s308 = sadd.s32 %s306, %s307
      %s309 = smul.addr %s308, 8
      %s310 = scalar_lea.vmem %s5, %s309
      %s311 = smul.u32 18, %s21
      %p312 = scmp.lt.s32.totalorder %s20, 1
      %s313 = scalar_select %p312, %s20, 1
      %p314 = scmp.lt.s32.totalorder %s311, 17
      %s315 = scalar_select %p314, %s311, 17
      %s316 = smul.addr %s313, 18
      %s317 = sadd.s32 %s315, %s316
      %s318 = smul.addr %s317, 8
      %s319 = scalar_lea.vmem %s0, %s318
      %s320 = smul.u32 18, %s21
      %s321 = smul.u32 %s21, 9
      %s322 = smul.u32 2, %s321
      %p323 = scmp.lt.s32.totalorder %s20, 1
      %s324 = scalar_select %p323, %s20, 1
      %p325 = scmp.lt.s32.totalorder %s322, 21
      %s326 = scalar_select %p325, %s322, 21
      %s327 = smul.addr %s324, 22
      %s328 = sadd.s32 %s326, %s327
      %s329 = smul.addr %s328, 8
      %s330 = scalar_lea.vmem %s1, %s329
      %s331 = smul.u32 %s21, 9
      %s332 = smul.u32 2, %s331
      %s333 = smul.u32 %s21, 9
      %s334 = sadd.s32 %s333, 10
      %s335 = smul.u32 2, %s334
      %p336 = scmp.lt.s32.totalorder %s20, 1
      %s337 = scalar_select %p336, %s20, 1
      %p338 = scmp.lt.s32.totalorder %s335, 21
      %s339 = scalar_select %p338, %s335, 21
      %s340 = smul.addr %s337, 22
      %s341 = sadd.s32 %s339, %s340
      %s342 = smul.addr %s341, 8
      %s343 = scalar_lea.vmem %s2, %s342
      %s344 = smul.u32 %s21, 9
      %s345 = sadd.s32 %s344, 10
      %s346 = smul.u32 2, %s345
      %s347 = smul.u32 18, %s21
      %p348 = scmp.lt.s32.totalorder %s20, 1
      %s349 = scalar_select %p348, %s20, 1
      %p350 = scmp.lt.s32.totalorder %s347, 17
      %s351 = scalar_select %p350, %s347, 17
      %s352 = smul.addr %s349, 18
      %s353 = sadd.s32 %s351, %s352
      %s354 = smul.addr %s353, 8
      %s355 = scalar_lea.vmem %s5, %s354
      %s356 = smul.u32 18, %s21
      %vm357 = vcmask 64512
      %358 = vst.msk [vmem:[#allocation2] sm:$0xff] %vm357, 0.0
      %359 = vst.msk [vmem:[#allocation2 + $0xb8] sm:$0xff] %vm357, 0.0
      %v360 = vld [vmem:[%s330] sm:$0xff]
      %v361 = vld [vmem:[%s330 + $0x8] sm:$0xff]
      %362 = vst.msk [vmem:[#allocation2 + $0x8] sm:$0xff] %vm357, %v360
      %363 = vst.msk [vmem:[#allocation2 + $0x10] sm:$0xff] %vm357, %v361
      %v364 = vld [vmem:[%s319] sm:$0xff]
      %v365 = vld [vmem:[%s319 + $0x8] sm:$0xff]
      %v366 = vld [vmem:[%s319 + $0x10] sm:$0xff]
      %v367 = vld [vmem:[%s319 + $0x18] sm:$0xff]
      %v368 = vld [vmem:[%s319 + $0x20] sm:$0xff]
      %v369 = vld [vmem:[%s319 + $0x28] sm:$0xff]
      %v370 = vld [vmem:[%s319 + $0x30] sm:$0xff]
      %v371 = vld [vmem:[%s319 + $0x38] sm:$0xff]
      %v372 = vld [vmem:[%s319 + $0x40] sm:$0xff]
      %v373 = vld [vmem:[%s319 + $0x48] sm:$0xff]
      %v374 = vld [vmem:[%s319 + $0x50] sm:$0xff]
      %v375 = vld [vmem:[%s319 + $0x58] sm:$0xff]
      %v376 = vld [vmem:[%s319 + $0x60] sm:$0xff]
      %v377 = vld [vmem:[%s319 + $0x68] sm:$0xff]
      %v378 = vld [vmem:[%s319 + $0x70] sm:$0xff]
      %v379 = vld [vmem:[%s319 + $0x78] sm:$0xff]
      %v380 = vld [vmem:[%s319 + $0x80] sm:$0xff]
      %v381 = vld [vmem:[%s319 + $0x88] sm:$0xff]
      %382 = vst.msk [vmem:[#allocation2 + $0x18] sm:$0xff] %vm357, %v364
      %383 = vst.msk [vmem:[#allocation2 + $0x20] sm:$0xff] %vm357, %v365
      %384 = vst.msk [vmem:[#allocation2 + $0x28] sm:$0xff] %vm357, %v366
      %385 = vst.msk [vmem:[#allocation2 + $0x30] sm:$0xff] %vm357, %v367
      %386 = vst.msk [vmem:[#allocation2 + $0x38] sm:$0xff] %vm357, %v368
      %387 = vst.msk [vmem:[#allocation2 + $0x40] sm:$0xff] %vm357, %v369
      %388 = vst.msk [vmem:[#allocation2 + $0x48] sm:$0xff] %vm357, %v370
      %389 = vst.msk [vmem:[#allocation2 + $0x50] sm:$0xff] %vm357, %v371
      %390 = vst.msk [vmem:[#allocation2 + $0x58] sm:$0xff] %vm357, %v372
      %391 = vst.msk [vmem:[#allocation2 + $0x60] sm:$0xff] %vm357, %v373
      %392 = vst.msk [vmem:[#allocation2 + $0x68] sm:$0xff] %vm357, %v374
      %393 = vst.msk [vmem:[#allocation2 + $0x70] sm:$0xff] %vm357, %v375
      %394 = vst.msk [vmem:[#allocation2 + $0x78] sm:$0xff] %vm357, %v376
      %395 = vst.msk [vmem:[#allocation2 + $0x80] sm:$0xff] %vm357, %v377
      %396 = vst.msk [vmem:[#allocation2 + $0x88] sm:$0xff] %vm357, %v378
      %397 = vst.msk [vmem:[#allocation2 + $0x90] sm:$0xff] %vm357, %v379
      %398 = vst.msk [vmem:[#allocation2 + $0x98] sm:$0xff] %vm357, %v380
      %399 = vst.msk [vmem:[#allocation2 + $0xa0] sm:$0xff] %vm357, %v381
      %v400 = vld [vmem:[%s343] sm:$0xff]
      %v401 = vld [vmem:[%s343 + $0x8] sm:$0xff]
      %402 = vst.msk [vmem:[#allocation2 + $0xa8] sm:$0xff] %vm357, %v400
      %403 = vst.msk [vmem:[#allocation2 + $0xb0] sm:$0xff] %vm357, %v401
      %v404 = vld [vmem:[#allocation2 + $0x7] sm:$0xff]
      %v405 = vld [vmem:[#allocation2 + $0xf] sm:$0xff]
      %v406 = vld [vmem:[#allocation2 + $0x17] sm:$0xff]
      %v407 = vld [vmem:[#allocation2 + $0x1f] sm:$0xff]
      %v408 = vld [vmem:[#allocation2 + $0x27] sm:$0xff]
      %v409 = vld [vmem:[#allocation2 + $0x2f] sm:$0xff]
      %v410 = vld [vmem:[#allocation2 + $0x37] sm:$0xff]
      %v411 = vld [vmem:[#allocation2 + $0x3f] sm:$0xff]
      %v412 = vld [vmem:[#allocation2 + $0x47] sm:$0xff]
      %v413 = vld [vmem:[#allocation2 + $0x4f] sm:$0xff]
      %v414 = vld [vmem:[#allocation2 + $0x57] sm:$0xff]
      %v415 = vld [vmem:[#allocation2 + $0x5f] sm:$0xff]
      %v416 = vld [vmem:[#allocation2 + $0x67] sm:$0xff]
      %v417 = vld [vmem:[#allocation2 + $0x6f] sm:$0xff]
      %v418 = vld [vmem:[#allocation2 + $0x77] sm:$0xff]
      %v419 = vld [vmem:[#allocation2 + $0x7f] sm:$0xff]
      %v420 = vld [vmem:[#allocation2 + $0x87] sm:$0xff]
      %v421 = vld [vmem:[#allocation2 + $0x8f] sm:$0xff]
      %v422 = vld [vmem:[%s3] sm:$0xff]
      %v423 = vld [vmem:[#allocation2 + $0x8] sm:$0xff]
      %v424 = vld [vmem:[#allocation2 + $0x10] sm:$0xff]
      %v425 = vld [vmem:[#allocation2 + $0x18] sm:$0xff]
      %v426 = vld [vmem:[#allocation2 + $0x20] sm:$0xff]
      %v427 = vld [vmem:[#allocation2 + $0x28] sm:$0xff]
      %v428 = vld [vmem:[#allocation2 + $0x30] sm:$0xff]
      %v429 = vld [vmem:[#allocation2 + $0x38] sm:$0xff]
      %v430 = vld [vmem:[#allocation2 + $0x40] sm:$0xff]
      %v431 = vld [vmem:[#allocation2 + $0x48] sm:$0xff]
      %v432 = vld [vmem:[#allocation2 + $0x50] sm:$0xff]
      %v433 = vld [vmem:[#allocation2 + $0x58] sm:$0xff]
      %v434 = vld [vmem:[#allocation2 + $0x60] sm:$0xff]
      %v435 = vld [vmem:[#allocation2 + $0x68] sm:$0xff]
      %v436 = vld [vmem:[#allocation2 + $0x70] sm:$0xff]
      %v437 = vld [vmem:[#allocation2 + $0x78] sm:$0xff]
      %v438 = vld [vmem:[#allocation2 + $0x80] sm:$0xff]
      %v439 = vld [vmem:[#allocation2 + $0x88] sm:$0xff]
      %v440 = vld [vmem:[#allocation2 + $0x90] sm:$0xff]
      %s441 = scalar_lea.vmem %s3, 8
      %v442 = vld [vmem:[%s441] sm:$0xff]
      %v444 = vsel %vm357, %v423, 0
      %v447 = vsel %vm357, %v424, 0
      %v450 = vsel %vm357, %v425, 0
      %v453 = vsel %vm357, %v426, 0
      %v456 = vsel %vm357, %v427, 0
      %v459 = vsel %vm357, %v428, 0
      %v462 = vsel %vm357, %v429, 0
      %v465 = vsel %vm357, %v430, 0
      %v468 = vsel %vm357, %v431, 0
      %v471 = vsel %vm357, %v432, 0
      %v474 = vsel %vm357, %v433, 0
      %v477 = vsel %vm357, %v434, 0
      %v480 = vsel %vm357, %v435, 0
      %v483 = vsel %vm357, %v436, 0
      %v486 = vsel %vm357, %v437, 0
      %v489 = vsel %vm357, %v438, 0
      %v492 = vsel %vm357, %v439, 0
      %v495 = vsel %vm357, %v440, 0
      %497 = vmatprep.subr.mxu0 0.0
      %498 = vmatpush1.msra.mxu0 0.0
      %499 = vmatprep.subr.mxu0 0.0
      %500 = vmatpush1.msra.mxu0 0.0
      %501 = vmatprep.subr.mxu0 0.0
      %502 = vmatpush1.msra.mxu0 0.0
      %503 = vmatprep.subr.mxu0 0.0
      %504 = vmatpush1.msra.mxu0 0.0
      %505 = vmatprep.subr.mxu0 0.0
      %506 = vmatpush1.msra.mxu0 0.0
      %507 = vmatprep.subr.mxu0 0.0
      %508 = vmatpush1.msra.mxu0 0.0
      %509 = vmatprep.subr.mxu0 0.0
      %510 = vmatpush1.msra.mxu0 0.0
      %511 = vmatprep.subr.mxu0 0.0
      %512 = vmatpush1.msra.mxu0 0.0
      %513 = vmatprep.subr.mxu0 0.0
      %514 = vmatpush1.msra.mxu0 0.0
      %515 = vmatprep.subr.mxu0 0.0
      %516 = vmatpush1.msra.mxu0 0.0
      %517 = vmatprep.subr.mxu0 0.0
      %518 = vmatpush1.msra.mxu0 0.0
      %519 = vmatprep.subr.mxu0 0.0
      %520 = vmatpush1.msra.mxu0 0.0
      %521 = vmatprep.subr.mxu0 0.0
      %522 = vmatpush1.msra.mxu0 0.0
      %523 = vmatprep.subr.mxu0 0.0
      %524 = vmatpush1.msra.mxu0 0.0
      %525 = vmatprep.subr.mxu0 0.0
      %526 = vmatpush1.msra.mxu0 0.0
      %527 = vmatprep.subr.mxu0 0.0
      %528 = vmatpush1.msra.mxu0 %v442
      %529 = vmatprep.subr.mxu0 0.0
      %530 = vmatpush2.msra.mxu0 0.0
      %531 = vmatprep.subr.mxu0 0.0
      %532 = vmatpush2.msra.mxu0 0.0
      %533 = vmatprep.subr.mxu0 0.0
      %534 = vmatpush2.msra.mxu0 0.0
      %535 = vmatprep.subr.mxu0 0.0
      %536 = vmatpush2.msra.mxu0 0.0
      %537 = vmatprep.subr.mxu0 0.0
      %538 = vmatpush2.msra.mxu0 0.0
      %539 = vmatprep.subr.mxu0 0.0
      %540 = vmatpush2.msra.mxu0 0.0
      %541 = vmatprep.subr.mxu0 0.0
      %542 = vmatpush2.msra.mxu0 0.0
      %543 = vmatprep.subr.mxu0 0.0
      %544 = vmatpush2.msra.mxu0 0.0
      %545 = vmatprep.subr.mxu0 0.0
      %546 = vmatpush2.msra.mxu0 0.0
      %547 = vmatprep.subr.mxu0 0.0
      %548 = vmatpush2.msra.mxu0 0.0
      %549 = vmatprep.subr.mxu0 0.0
      %550 = vmatpush2.msra.mxu0 0.0
      %551 = vmatprep.subr.mxu0 0.0
      %552 = vmatpush2.msra.mxu0 0.0
      %553 = vmatprep.subr.mxu0 0.0
      %554 = vmatpush2.msra.mxu0 0.0
      %555 = vmatprep.subr.mxu0 0.0
      %556 = vmatpush2.msra.mxu0 0.0
      %557 = vmatprep.subr.mxu0 0.0
      %558 = vmatpush2.msra.mxu0 0.0
      %559 = vmatprep.subr.mxu0 0.0
      %560 = vmatpush2.msra.mxu0 0.0
      %561 = vmatprep.mubr.f32.mxu0 0.0
      %562 = vmatmul.mubr.f32.gmra.mxu0 %v444
      %v563 = vpop.f32.mrf.mxu0
      %v564 = vadd.f32 0.0, %v563
      %v565 = vpop.f32.mrf.mxu0
      %566 = vmatprep.mubr.f32.mxu0 0.0
      %567 = vmatmul.mubr.f32.gmra.mxu0 %v447
      %v568 = vpop.f32.mrf.mxu0
      %v569 = vadd.f32 0.0, %v568
      %v570 = vpop.f32.mrf.mxu0
      %571 = vmatprep.mubr.f32.mxu0 0.0
      %572 = vmatmul.mubr.f32.gmra.mxu0 %v450
      %v573 = vpop.f32.mrf.mxu0
      %v574 = vadd.f32 0.0, %v573
      %v575 = vpop.f32.mrf.mxu0
      %576 = vmatprep.mubr.f32.mxu0 0.0
      %577 = vmatmul.mubr.f32.gmra.mxu0 %v453
      %v578 = vpop.f32.mrf.mxu0
      %v579 = vadd.f32 0.0, %v578
      %v580 = vpop.f32.mrf.mxu0
      %581 = vmatprep.mubr.f32.mxu0 0.0
      %582 = vmatmul.mubr.f32.gmra.mxu0 %v456
      %v583 = vpop.f32.mrf.mxu0
      %v584 = vadd.f32 0.0, %v583
      %v585 = vpop.f32.mrf.mxu0
      %586 = vmatprep.mubr.f32.mxu0 0.0
      %587 = vmatmul.mubr.f32.gmra.mxu0 %v459
      %v588 = vpop.f32.mrf.mxu0
      %v589 = vadd.f32 0.0, %v588
      %v590 = vpop.f32.mrf.mxu0
      %591 = vmatprep.mubr.f32.mxu0 0.0
      %592 = vmatmul.mubr.f32.gmra.mxu0 %v462
      %v593 = vpop.f32.mrf.mxu0
      %v594 = vadd.f32 0.0, %v593
      %v595 = vpop.f32.mrf.mxu0
      %596 = vmatprep.mubr.f32.mxu0 0.0
      %597 = vmatmul.mubr.f32.gmra.mxu0 %v465
      %v598 = vpop.f32.mrf.mxu0
      %v599 = vadd.f32 0.0, %v598
      %v600 = vpop.f32.mrf.mxu0
      %601 = vmatprep.mubr.f32.mxu0 0.0
      %602 = vmatmul.mubr.f32.gmra.mxu0 %v468
      %v603 = vpop.f32.mrf.mxu0
      %v604 = vadd.f32 0.0, %v603
      %v605 = vpop.f32.mrf.mxu0
      %606 = vmatprep.mubr.f32.mxu0 0.0
      %607 = vmatmul.mubr.f32.gmra.mxu0 %v471
      %v608 = vpop.f32.mrf.mxu0
      %v609 = vadd.f32 0.0, %v608
      %v610 = vpop.f32.mrf.mxu0
      %611 = vmatprep.mubr.f32.mxu0 0.0
      %612 = vmatmul.mubr.f32.gmra.mxu0 %v474
      %v613 = vpop.f32.mrf.mxu0
      %v614 = vadd.f32 0.0, %v613
      %v615 = vpop.f32.mrf.mxu0
      %616 = vmatprep.mubr.f32.mxu0 0.0
      %617 = vmatmul.mubr.f32.gmra.mxu0 %v477
      %v618 = vpop.f32.mrf.mxu0
      %v619 = vadd.f32 0.0, %v618
      %v620 = vpop.f32.mrf.mxu0
      %621 = vmatprep.mubr.f32.mxu0 0.0
      %622 = vmatmul.mubr.f32.gmra.mxu0 %v480
      %v623 = vpop.f32.mrf.mxu0
      %v624 = vadd.f32 0.0, %v623
      %v625 = vpop.f32.mrf.mxu0
      %626 = vmatprep.mubr.f32.mxu0 0.0
      %627 = vmatmul.mubr.f32.gmra.mxu0 %v483
      %v628 = vpop.f32.mrf.mxu0
      %v629 = vadd.f32 0.0, %v628
      %v630 = vpop.f32.mrf.mxu0
      %631 = vmatprep.mubr.f32.mxu0 0.0
      %632 = vmatmul.mubr.f32.gmra.mxu0 %v486
      %v633 = vpop.f32.mrf.mxu0
      %v634 = vadd.f32 0.0, %v633
      %v635 = vpop.f32.mrf.mxu0
      %636 = vmatprep.mubr.f32.mxu0 0.0
      %637 = vmatmul.mubr.f32.gmra.mxu0 %v489
      %v638 = vpop.f32.mrf.mxu0
      %v639 = vadd.f32 0.0, %v638
      %v640 = vpop.f32.mrf.mxu0
      %641 = vmatprep.mubr.f32.mxu0 0.0
      %642 = vmatmul.mubr.f32.gmra.mxu0 %v492
      %v643 = vpop.f32.mrf.mxu0
      %v644 = vadd.f32 0.0, %v643
      %v645 = vpop.f32.mrf.mxu0
      %646 = vmatprep.mubr.f32.mxu0 0.0
      %647 = vmatmul.mubr.f32.gmra.mxu0 %v495
      %v648 = vpop.f32.mrf.mxu0
      %v649 = vadd.f32 0.0, %v648
      %v650 = vpop.f32.mrf.mxu0
      %651 = vdwg.mxu0
      %v653 = vsel %vm357, %v404, 0
      %v656 = vsel %vm357, %v405, 0
      %v659 = vsel %vm357, %v406, 0
      %v662 = vsel %vm357, %v407, 0
      %v665 = vsel %vm357, %v408, 0
      %v668 = vsel %vm357, %v409, 0
      %v671 = vsel %vm357, %v410, 0
      %v674 = vsel %vm357, %v411, 0
      %v677 = vsel %vm357, %v412, 0
      %v680 = vsel %vm357, %v413, 0
      %v683 = vsel %vm357, %v414, 0
      %v686 = vsel %vm357, %v415, 0
      %v689 = vsel %vm357, %v416, 0
      %v692 = vsel %vm357, %v417, 0
      %v695 = vsel %vm357, %v418, 0
      %v698 = vsel %vm357, %v419, 0
      %v701 = vsel %vm357, %v420, 0
      %v704 = vsel %vm357, %v421, 0
      %706 = vmatprep.subr.mxu0 0.0
      %707 = vmatpush1.msra.mxu0 0.0
      %708 = vmatprep.subr.mxu0 0.0
      %709 = vmatpush1.msra.mxu0 0.0
      %710 = vmatprep.subr.mxu0 0.0
      %711 = vmatpush1.msra.mxu0 0.0
      %712 = vmatprep.subr.mxu0 0.0
      %713 = vmatpush1.msra.mxu0 0.0
      %714 = vmatprep.subr.mxu0 0.0
      %715 = vmatpush1.msra.mxu0 0.0
      %716 = vmatprep.subr.mxu0 0.0
      %717 = vmatpush1.msra.mxu0 0.0
      %718 = vmatprep.subr.mxu0 0.0
      %719 = vmatpush1.msra.mxu0 0.0
      %720 = vmatprep.subr.mxu0 0.0
      %721 = vmatpush1.msra.mxu0 0.0
      %722 = vmatprep.subr.mxu0 0.0
      %723 = vmatpush1.msra.mxu0 0.0
      %724 = vmatprep.subr.mxu0 0.0
      %725 = vmatpush1.msra.mxu0 0.0
      %726 = vmatprep.subr.mxu0 0.0
      %727 = vmatpush1.msra.mxu0 0.0
      %728 = vmatprep.subr.mxu0 0.0
      %729 = vmatpush1.msra.mxu0 0.0
      %730 = vmatprep.subr.mxu0 0.0
      %731 = vmatpush1.msra.mxu0 0.0
      %732 = vmatprep.subr.mxu0 0.0
      %733 = vmatpush1.msra.mxu0 0.0
      %734 = vmatprep.subr.mxu0 0.0
      %735 = vmatpush1.msra.mxu0 0.0
      %736 = vmatprep.subr.mxu0 0.0
      %737 = vmatpush1.msra.mxu0 %v422
      %738 = vmatprep.subr.mxu0 0.0
      %739 = vmatpush2.msra.mxu0 0.0
      %740 = vmatprep.subr.mxu0 0.0
      %741 = vmatpush2.msra.mxu0 0.0
      %742 = vmatprep.subr.mxu0 0.0
      %743 = vmatpush2.msra.mxu0 0.0
      %744 = vmatprep.subr.mxu0 0.0
      %745 = vmatpush2.msra.mxu0 0.0
      %746 = vmatprep.subr.mxu0 0.0
      %747 = vmatpush2.msra.mxu0 0.0
      %748 = vmatprep.subr.mxu0 0.0
      %749 = vmatpush2.msra.mxu0 0.0
      %750 = vmatprep.subr.mxu0 0.0
      %751 = vmatpush2.msra.mxu0 0.0
      %752 = vmatprep.subr.mxu0 0.0
      %753 = vmatpush2.msra.mxu0 0.0
      %754 = vmatprep.subr.mxu0 0.0
      %755 = vmatpush2.msra.mxu0 0.0
      %756 = vmatprep.subr.mxu0 0.0
      %757 = vmatpush2.msra.mxu0 0.0
      %758 = vmatprep.subr.mxu0 0.0
      %759 = vmatpush2.msra.mxu0 0.0
      %760 = vmatprep.subr.mxu0 0.0
      %761 = vmatpush2.msra.mxu0 0.0
      %762 = vmatprep.subr.mxu0 0.0
      %763 = vmatpush2.msra.mxu0 0.0
      %764 = vmatprep.subr.mxu0 0.0
      %765 = vmatpush2.msra.mxu0 0.0
      %766 = vmatprep.subr.mxu0 0.0
      %767 = vmatpush2.msra.mxu0 0.0
      %768 = vmatprep.subr.mxu0 0.0
      %769 = vmatpush2.msra.mxu0 0.0
      %770 = vmatprep.mubr.f32.mxu0 0.0
      %771 = vmatmul.mubr.f32.gmra.mxu0 %v653
      %v772 = vpop.f32.mrf.mxu0
      %v773 = vadd.f32 %v564, %v772
      %v774 = vpop.f32.mrf.mxu0
      %775 = vmatprep.mubr.f32.mxu0 0.0
      %776 = vmatmul.mubr.f32.gmra.mxu0 %v656
      %v777 = vpop.f32.mrf.mxu0
      %v778 = vadd.f32 %v569, %v777
      %v779 = vpop.f32.mrf.mxu0
      %780 = vmatprep.mubr.f32.mxu0 0.0
      %781 = vmatmul.mubr.f32.gmra.mxu0 %v659
      %v782 = vpop.f32.mrf.mxu0
      %v783 = vadd.f32 %v574, %v782
      %v784 = vpop.f32.mrf.mxu0
      %785 = vmatprep.mubr.f32.mxu0 0.0
      %786 = vmatmul.mubr.f32.gmra.mxu0 %v662
      %v787 = vpop.f32.mrf.mxu0
      %v788 = vadd.f32 %v579, %v787
      %v789 = vpop.f32.mrf.mxu0
      %790 = vmatprep.mubr.f32.mxu0 0.0
      %791 = vmatmul.mubr.f32.gmra.mxu0 %v665
      %v792 = vpop.f32.mrf.mxu0
      %v793 = vadd.f32 %v584, %v792
      %v794 = vpop.f32.mrf.mxu0
      %795 = vmatprep.mubr.f32.mxu0 0.0
      %796 = vmatmul.mubr.f32.gmra.mxu0 %v668
      %v797 = vpop.f32.mrf.mxu0
      %v798 = vadd.f32 %v589, %v797
      %v799 = vpop.f32.mrf.mxu0
      %800 = vmatprep.mubr.f32.mxu0 0.0
      %801 = vmatmul.mubr.f32.gmra.mxu0 %v671
      %v802 = vpop.f32.mrf.mxu0
      %v803 = vadd.f32 %v594, %v802
      %v804 = vpop.f32.mrf.mxu0
      %805 = vmatprep.mubr.f32.mxu0 0.0
      %806 = vmatmul.mubr.f32.gmra.mxu0 %v674
      %v807 = vpop.f32.mrf.mxu0
      %v808 = vadd.f32 %v599, %v807
      %v809 = vpop.f32.mrf.mxu0
      %810 = vmatprep.mubr.f32.mxu0 0.0
      %811 = vmatmul.mubr.f32.gmra.mxu0 %v677
      %v812 = vpop.f32.mrf.mxu0
      %v813 = vadd.f32 %v604, %v812
      %v814 = vpop.f32.mrf.mxu0
      %815 = vmatprep.mubr.f32.mxu0 0.0
      %816 = vmatmul.mubr.f32.gmra.mxu0 %v680
      %v817 = vpop.f32.mrf.mxu0
      %v818 = vadd.f32 %v609, %v817
      %v819 = vpop.f32.mrf.mxu0
      %820 = vmatprep.mubr.f32.mxu0 0.0
      %821 = vmatmul.mubr.f32.gmra.mxu0 %v683
      %v822 = vpop.f32.mrf.mxu0
      %v823 = vadd.f32 %v614, %v822
      %v824 = vpop.f32.mrf.mxu0
      %825 = vmatprep.mubr.f32.mxu0 0.0
      %826 = vmatmul.mubr.f32.gmra.mxu0 %v686
      %v827 = vpop.f32.mrf.mxu0
      %v828 = vadd.f32 %v619, %v827
      %v829 = vpop.f32.mrf.mxu0
      %830 = vmatprep.mubr.f32.mxu0 0.0
      %831 = vmatmul.mubr.f32.gmra.mxu0 %v689
      %v832 = vpop.f32.mrf.mxu0
      %v833 = vadd.f32 %v624, %v832
      %v834 = vpop.f32.mrf.mxu0
      %835 = vmatprep.mubr.f32.mxu0 0.0
      %836 = vmatmul.mubr.f32.gmra.mxu0 %v692
      %v837 = vpop.f32.mrf.mxu0
      %v838 = vadd.f32 %v629, %v837
      %v839 = vpop.f32.mrf.mxu0
      %840 = vmatprep.mubr.f32.mxu0 0.0
      %841 = vmatmul.mubr.f32.gmra.mxu0 %v695
      %v842 = vpop.f32.mrf.mxu0
      %v843 = vadd.f32 %v634, %v842
      %v844 = vpop.f32.mrf.mxu0
      %845 = vmatprep.mubr.f32.mxu0 0.0
      %846 = vmatmul.mubr.f32.gmra.mxu0 %v698
      %v847 = vpop.f32.mrf.mxu0
      %v848 = vadd.f32 %v639, %v847
      %v849 = vpop.f32.mrf.mxu0
      %850 = vmatprep.mubr.f32.mxu0 0.0
      %851 = vmatmul.mubr.f32.gmra.mxu0 %v701
      %v852 = vpop.f32.mrf.mxu0
      %v853 = vadd.f32 %v644, %v852
      %v854 = vpop.f32.mrf.mxu0
      %855 = vmatprep.mubr.f32.mxu0 0.0
      %856 = vmatmul.mubr.f32.gmra.mxu0 %v704
      %v857 = vpop.f32.mrf.mxu0
      %v858 = vadd.f32 %v649, %v857
      %v859 = vpop.f32.mrf.mxu0
      %860 = vdwg.mxu0
      %v861 = vld [vmem:[#allocation2 + $0x9] sm:$0xff]
      %v862 = vld [vmem:[#allocation2 + $0x11] sm:$0xff]
      %v863 = vld [vmem:[#allocation2 + $0x19] sm:$0xff]
      %v864 = vld [vmem:[#allocation2 + $0x21] sm:$0xff]
      %v865 = vld [vmem:[#allocation2 + $0x29] sm:$0xff]
      %v866 = vld [vmem:[#allocation2 + $0x31] sm:$0xff]
      %v867 = vld [vmem:[#allocation2 + $0x39] sm:$0xff]
      %v868 = vld [vmem:[#allocation2 + $0x41] sm:$0xff]
      %v869 = vld [vmem:[#allocation2 + $0x49] sm:$0xff]
      %v870 = vld [vmem:[#allocation2 + $0x51] sm:$0xff]
      %v871 = vld [vmem:[#allocation2 + $0x59] sm:$0xff]
      %v872 = vld [vmem:[#allocation2 + $0x61] sm:$0xff]
      %v873 = vld [vmem:[#allocation2 + $0x69] sm:$0xff]
      %v874 = vld [vmem:[#allocation2 + $0x71] sm:$0xff]
      %v875 = vld [vmem:[#allocation2 + $0x79] sm:$0xff]
      %v876 = vld [vmem:[#allocation2 + $0x81] sm:$0xff]
      %v877 = vld [vmem:[#allocation2 + $0x89] sm:$0xff]
      %v878 = vld [vmem:[#allocation2 + $0x91] sm:$0xff]
      %s879 = scalar_lea.vmem %s3, 16
      %v880 = vld [vmem:[%s879] sm:$0xff]
      %v882 = vsel %vm357, %v861, 0
      %v885 = vsel %vm357, %v862, 0
      %v888 = vsel %vm357, %v863, 0
      %v891 = vsel %vm357, %v864, 0
      %v894 = vsel %vm357, %v865, 0
      %v897 = vsel %vm357, %v866, 0
      %v900 = vsel %vm357, %v867, 0
      %v903 = vsel %vm357, %v868, 0
      %v906 = vsel %vm357, %v869, 0
      %v909 = vsel %vm357, %v870, 0
      %v912 = vsel %vm357, %v871, 0
      %v915 = vsel %vm357, %v872, 0
      %v918 = vsel %vm357, %v873, 0
      %v921 = vsel %vm357, %v874, 0
      %v924 = vsel %vm357, %v875, 0
      %v927 = vsel %vm357, %v876, 0
      %v930 = vsel %vm357, %v877, 0
      %v933 = vsel %vm357, %v878, 0
      %935 = vmatprep.subr.mxu0 0.0
      %936 = vmatpush1.msra.mxu0 0.0
      %937 = vmatprep.subr.mxu0 0.0
      %938 = vmatpush1.msra.mxu0 0.0
      %939 = vmatprep.subr.mxu0 0.0
      %940 = vmatpush1.msra.mxu0 0.0
      %941 = vmatprep.subr.mxu0 0.0
      %942 = vmatpush1.msra.mxu0 0.0
      %943 = vmatprep.subr.mxu0 0.0
      %944 = vmatpush1.msra.mxu0 0.0
      %945 = vmatprep.subr.mxu0 0.0
      %946 = vmatpush1.msra.mxu0 0.0
      %947 = vmatprep.subr.mxu0 0.0
      %948 = vmatpush1.msra.mxu0 0.0
      %949 = vmatprep.subr.mxu0 0.0
      %950 = vmatpush1.msra.mxu0 0.0
      %951 = vmatprep.subr.mxu0 0.0
      %952 = vmatpush1.msra.mxu0 0.0
      %953 = vmatprep.subr.mxu0 0.0
      %954 = vmatpush1.msra.mxu0 0.0
      %955 = vmatprep.subr.mxu0 0.0
      %956 = vmatpush1.msra.mxu0 0.0
      %957 = vmatprep.subr.mxu0 0.0
      %958 = vmatpush1.msra.mxu0 0.0
      %959 = vmatprep.subr.mxu0 0.0
      %960 = vmatpush1.msra.mxu0 0.0
      %961 = vmatprep.subr.mxu0 0.0
      %962 = vmatpush1.msra.mxu0 0.0
      %963 = vmatprep.subr.mxu0 0.0
      %964 = vmatpush1.msra.mxu0 0.0
      %965 = vmatprep.subr.mxu0 0.0
      %966 = vmatpush1.msra.mxu0 %v880
      %967 = vmatprep.subr.mxu0 0.0
      %968 = vmatpush2.msra.mxu0 0.0
      %969 = vmatprep.subr.mxu0 0.0
      %970 = vmatpush2.msra.mxu0 0.0
      %971 = vmatprep.subr.mxu0 0.0
      %972 = vmatpush2.msra.mxu0 0.0
      %973 = vmatprep.subr.mxu0 0.0
      %974 = vmatpush2.msra.mxu0 0.0
      %975 = vmatprep.subr.mxu0 0.0
      %976 = vmatpush2.msra.mxu0 0.0
      %977 = vmatprep.subr.mxu0 0.0
      %978 = vmatpush2.msra.mxu0 0.0
      %979 = vmatprep.subr.mxu0 0.0
      %980 = vmatpush2.msra.mxu0 0.0
      %981 = vmatprep.subr.mxu0 0.0
      %982 = vmatpush2.msra.mxu0 0.0
      %983 = vmatprep.subr.mxu0 0.0
      %984 = vmatpush2.msra.mxu0 0.0
      %985 = vmatprep.subr.mxu0 0.0
      %986 = vmatpush2.msra.mxu0 0.0
      %987 = vmatprep.subr.mxu0 0.0
      %988 = vmatpush2.msra.mxu0 0.0
      %989 = vmatprep.subr.mxu0 0.0
      %990 = vmatpush2.msra.mxu0 0.0
      %991 = vmatprep.subr.mxu0 0.0
      %992 = vmatpush2.msra.mxu0 0.0
      %993 = vmatprep.subr.mxu0 0.0
      %994 = vmatpush2.msra.mxu0 0.0
      %995 = vmatprep.subr.mxu0 0.0
      %996 = vmatpush2.msra.mxu0 0.0
      %997 = vmatprep.subr.mxu0 0.0
      %998 = vmatpush2.msra.mxu0 0.0
      %999 = vmatprep.mubr.f32.mxu0 0.0
      %1000 = vmatmul.mubr.f32.gmra.mxu0 %v882
      %v1001 = vpop.f32.mrf.mxu0
      %v1002 = vadd.f32 0.0, %v1001
      %v1003 = vpop.f32.mrf.mxu0
      %1004 = vmatprep.mubr.f32.mxu0 0.0
      %1005 = vmatmul.mubr.f32.gmra.mxu0 %v885
      %v1006 = vpop.f32.mrf.mxu0
      %v1007 = vadd.f32 0.0, %v1006
      %v1008 = vpop.f32.mrf.mxu0
      %1009 = vmatprep.mubr.f32.mxu0 0.0
      %1010 = vmatmul.mubr.f32.gmra.mxu0 %v888
      %v1011 = vpop.f32.mrf.mxu0
      %v1012 = vadd.f32 0.0, %v1011
      %v1013 = vpop.f32.mrf.mxu0
      %1014 = vmatprep.mubr.f32.mxu0 0.0
      %1015 = vmatmul.mubr.f32.gmra.mxu0 %v891
      %v1016 = vpop.f32.mrf.mxu0
      %v1017 = vadd.f32 0.0, %v1016
      %v1018 = vpop.f32.mrf.mxu0
      %1019 = vmatprep.mubr.f32.mxu0 0.0
      %1020 = vmatmul.mubr.f32.gmra.mxu0 %v894
      %v1021 = vpop.f32.mrf.mxu0
      %v1022 = vadd.f32 0.0, %v1021
      %v1023 = vpop.f32.mrf.mxu0
      %1024 = vmatprep.mubr.f32.mxu0 0.0
      %1025 = vmatmul.mubr.f32.gmra.mxu0 %v897
      %v1026 = vpop.f32.mrf.mxu0
      %v1027 = vadd.f32 0.0, %v1026
      %v1028 = vpop.f32.mrf.mxu0
      %1029 = vmatprep.mubr.f32.mxu0 0.0
      %1030 = vmatmul.mubr.f32.gmra.mxu0 %v900
      %v1031 = vpop.f32.mrf.mxu0
      %v1032 = vadd.f32 0.0, %v1031
      %v1033 = vpop.f32.mrf.mxu0
      %1034 = vmatprep.mubr.f32.mxu0 0.0
      %1035 = vmatmul.mubr.f32.gmra.mxu0 %v903
      %v1036 = vpop.f32.mrf.mxu0
      %v1037 = vadd.f32 0.0, %v1036
      %v1038 = vpop.f32.mrf.mxu0
      %1039 = vmatprep.mubr.f32.mxu0 0.0
      %1040 = vmatmul.mubr.f32.gmra.mxu0 %v906
      %v1041 = vpop.f32.mrf.mxu0
      %v1042 = vadd.f32 0.0, %v1041
      %v1043 = vpop.f32.mrf.mxu0
      %1044 = vmatprep.mubr.f32.mxu0 0.0
      %1045 = vmatmul.mubr.f32.gmra.mxu0 %v909
      %v1046 = vpop.f32.mrf.mxu0
      %v1047 = vadd.f32 0.0, %v1046
      %v1048 = vpop.f32.mrf.mxu0
      %1049 = vmatprep.mubr.f32.mxu0 0.0
      %1050 = vmatmul.mubr.f32.gmra.mxu0 %v912
      %v1051 = vpop.f32.mrf.mxu0
      %v1052 = vadd.f32 0.0, %v1051
      %v1053 = vpop.f32.mrf.mxu0
      %1054 = vmatprep.mubr.f32.mxu0 0.0
      %1055 = vmatmul.mubr.f32.gmra.mxu0 %v915
      %v1056 = vpop.f32.mrf.mxu0
      %v1057 = vadd.f32 0.0, %v1056
      %v1058 = vpop.f32.mrf.mxu0
      %1059 = vmatprep.mubr.f32.mxu0 0.0
      %1060 = vmatmul.mubr.f32.gmra.mxu0 %v918
      %v1061 = vpop.f32.mrf.mxu0
      %v1062 = vadd.f32 0.0, %v1061
      %v1063 = vpop.f32.mrf.mxu0
      %1064 = vmatprep.mubr.f32.mxu0 0.0
      %1065 = vmatmul.mubr.f32.gmra.mxu0 %v921
      %v1066 = vpop.f32.mrf.mxu0
      %v1067 = vadd.f32 0.0, %v1066
      %v1068 = vpop.f32.mrf.mxu0
      %1069 = vmatprep.mubr.f32.mxu0 0.0
      %1070 = vmatmul.mubr.f32.gmra.mxu0 %v924
      %v1071 = vpop.f32.mrf.mxu0
      %v1072 = vadd.f32 0.0, %v1071
      %v1073 = vpop.f32.mrf.mxu0
      %1074 = vmatprep.mubr.f32.mxu0 0.0
      %1075 = vmatmul.mubr.f32.gmra.mxu0 %v927
      %v1076 = vpop.f32.mrf.mxu0
      %v1077 = vadd.f32 0.0, %v1076
      %v1078 = vpop.f32.mrf.mxu0
      %1079 = vmatprep.mubr.f32.mxu0 0.0
      %1080 = vmatmul.mubr.f32.gmra.mxu0 %v930
      %v1081 = vpop.f32.mrf.mxu0
      %v1082 = vadd.f32 0.0, %v1081
      %v1083 = vpop.f32.mrf.mxu0
      %1084 = vmatprep.mubr.f32.mxu0 0.0
      %1085 = vmatmul.mubr.f32.gmra.mxu0 %v933
      %v1086 = vpop.f32.mrf.mxu0
      %v1087 = vadd.f32 0.0, %v1086
      %v1088 = vpop.f32.mrf.mxu0
      %1089 = vdwg.mxu0
      %v1090 = vadd.f32 %v773, %v1002
      %v1091 = vadd.f32 %v778, %v1007
      %v1092 = vadd.f32 %v783, %v1012
      %v1093 = vadd.f32 %v788, %v1017
      %v1094 = vadd.f32 %v793, %v1022
      %v1095 = vadd.f32 %v798, %v1027
      %v1096 = vadd.f32 %v803, %v1032
      %v1097 = vadd.f32 %v808, %v1037
      %v1098 = vadd.f32 %v813, %v1042
      %v1099 = vadd.f32 %v818, %v1047
      %v1100 = vadd.f32 %v823, %v1052
      %v1101 = vadd.f32 %v828, %v1057
      %v1102 = vadd.f32 %v833, %v1062
      %v1103 = vadd.f32 %v838, %v1067
      %v1104 = vadd.f32 %v843, %v1072
      %v1105 = vadd.f32 %v848, %v1077
      %v1106 = vadd.f32 %v853, %v1082
      %v1107 = vadd.f32 %v858, %v1087
      %v1108 = vld [vmem:[#allocation2 + $0x17] sm:$0xff]
      %v1109 = vld [vmem:[#allocation2 + $0x1f] sm:$0xff]
      %v1110 = vld [vmem:[#allocation2 + $0x27] sm:$0xff]
      %v1111 = vld [vmem:[#allocation2 + $0x2f] sm:$0xff]
      %v1112 = vld [vmem:[#allocation2 + $0x37] sm:$0xff]
      %v1113 = vld [vmem:[#allocation2 + $0x3f] sm:$0xff]
      %v1114 = vld [vmem:[#allocation2 + $0x47] sm:$0xff]
      %v1115 = vld [vmem:[#allocation2 + $0x4f] sm:$0xff]
      %v1116 = vld [vmem:[#allocation2 + $0x57] sm:$0xff]
      %v1117 = vld [vmem:[#allocation2 + $0x5f] sm:$0xff]
      %v1118 = vld [vmem:[#allocation2 + $0x67] sm:$0xff]
      %v1119 = vld [vmem:[#allocation2 + $0x6f] sm:$0xff]
      %v1120 = vld [vmem:[#allocation2 + $0x77] sm:$0xff]
      %v1121 = vld [vmem:[#allocation2 + $0x7f] sm:$0xff]
      %v1122 = vld [vmem:[#allocation2 + $0x87] sm:$0xff]
      %v1123 = vld [vmem:[#allocation2 + $0x8f] sm:$0xff]
      %v1124 = vld [vmem:[#allocation2 + $0x97] sm:$0xff]
      %v1125 = vld [vmem:[#allocation2 + $0x9f] sm:$0xff]
      %s1126 = scalar_lea.vmem %s3, 24
      %v1127 = vld [vmem:[%s1126] sm:$0xff]
      %v1129 = vsel %vm357, %v1108, 0
      %v1132 = vsel %vm357, %v1109, 0
      %v1135 = vsel %vm357, %v1110, 0
      %v1138 = vsel %vm357, %v1111, 0
      %v1141 = vsel %vm357, %v1112, 0
      %v1144 = vsel %vm357, %v1113, 0
      %v1147 = vsel %vm357, %v1114, 0
      %v1150 = vsel %vm357, %v1115, 0
      %v1153 = vsel %vm357, %v1116, 0
      %v1156 = vsel %vm357, %v1117, 0
      %v1159 = vsel %vm357, %v1118, 0
      %v1162 = vsel %vm357, %v1119, 0
      %v1165 = vsel %vm357, %v1120, 0
      %v1168 = vsel %vm357, %v1121, 0
      %v1171 = vsel %vm357, %v1122, 0
      %v1174 = vsel %vm357, %v1123, 0
      %v1177 = vsel %vm357, %v1124, 0
      %v1180 = vsel %vm357, %v1125, 0
      %1182 = vmatprep.subr.mxu0 0.0
      %1183 = vmatpush1.msra.mxu0 0.0
      %1184 = vmatprep.subr.mxu0 0.0
      %1185 = vmatpush1.msra.mxu0 0.0
      %1186 = vmatprep.subr.mxu0 0.0
      %1187 = vmatpush1.msra.mxu0 0.0
      %1188 = vmatprep.subr.mxu0 0.0
      %1189 = vmatpush1.msra.mxu0 0.0
      %1190 = vmatprep.subr.mxu0 0.0
      %1191 = vmatpush1.msra.mxu0 0.0
      %1192 = vmatprep.subr.mxu0 0.0
      %1193 = vmatpush1.msra.mxu0 0.0
      %1194 = vmatprep.subr.mxu0 0.0
      %1195 = vmatpush1.msra.mxu0 0.0
      %1196 = vmatprep.subr.mxu0 0.0
      %1197 = vmatpush1.msra.mxu0 0.0
      %1198 = vmatprep.subr.mxu0 0.0
      %1199 = vmatpush1.msra.mxu0 0.0
      %1200 = vmatprep.subr.mxu0 0.0
      %1201 = vmatpush1.msra.mxu0 0.0
      %1202 = vmatprep.subr.mxu0 0.0
      %1203 = vmatpush1.msra.mxu0 0.0
      %1204 = vmatprep.subr.mxu0 0.0
      %1205 = vmatpush1.msra.mxu0 0.0
      %1206 = vmatprep.subr.mxu0 0.0
      %1207 = vmatpush1.msra.mxu0 0.0
      %1208 = vmatprep.subr.mxu0 0.0
      %1209 = vmatpush1.msra.mxu0 0.0
      %1210 = vmatprep.subr.mxu0 0.0
      %1211 = vmatpush1.msra.mxu0 0.0
      %1212 = vmatprep.subr.mxu0 0.0
      %1213 = vmatpush1.msra.mxu0 %v1127
      %1214 = vmatprep.subr.mxu0 0.0
      %1215 = vmatpush2.msra.mxu0 0.0
      %1216 = vmatprep.subr.mxu0 0.0
      %1217 = vmatpush2.msra.mxu0 0.0
      %1218 = vmatprep.subr.mxu0 0.0
      %1219 = vmatpush2.msra.mxu0 0.0
      %1220 = vmatprep.subr.mxu0 0.0
      %1221 = vmatpush2.msra.mxu0 0.0
      %1222 = vmatprep.subr.mxu0 0.0
      %1223 = vmatpush2.msra.mxu0 0.0
      %1224 = vmatprep.subr.mxu0 0.0
      %1225 = vmatpush2.msra.mxu0 0.0
      %1226 = vmatprep.subr.mxu0 0.0
      %1227 = vmatpush2.msra.mxu0 0.0
      %1228 = vmatprep.subr.mxu0 0.0
      %1229 = vmatpush2.msra.mxu0 0.0
      %1230 = vmatprep.subr.mxu0 0.0
      %1231 = vmatpush2.msra.mxu0 0.0
      %1232 = vmatprep.subr.mxu0 0.0
      %1233 = vmatpush2.msra.mxu0 0.0
      %1234 = vmatprep.subr.mxu0 0.0
      %1235 = vmatpush2.msra.mxu0 0.0
      %1236 = vmatprep.subr.mxu0 0.0
      %1237 = vmatpush2.msra.mxu0 0.0
      %1238 = vmatprep.subr.mxu0 0.0
      %1239 = vmatpush2.msra.mxu0 0.0
      %1240 = vmatprep.subr.mxu0 0.0
      %1241 = vmatpush2.msra.mxu0 0.0
      %1242 = vmatprep.subr.mxu0 0.0
      %1243 = vmatpush2.msra.mxu0 0.0
      %1244 = vmatprep.subr.mxu0 0.0
      %1245 = vmatpush2.msra.mxu0 0.0
      %1246 = vmatprep.mubr.f32.mxu0 0.0
      %1247 = vmatmul.mubr.f32.gmra.mxu0 %v1129
      %v1248 = vpop.f32.mrf.mxu0
      %v1249 = vadd.f32 0.0, %v1248
      %v1250 = vpop.f32.mrf.mxu0
      %1251 = vmatprep.mubr.f32.mxu0 0.0
      %1252 = vmatmul.mubr.f32.gmra.mxu0 %v1132
      %v1253 = vpop.f32.mrf.mxu0
      %v1254 = vadd.f32 0.0, %v1253
      %v1255 = vpop.f32.mrf.mxu0
      %1256 = vmatprep.mubr.f32.mxu0 0.0
      %1257 = vmatmul.mubr.f32.gmra.mxu0 %v1135
      %v1258 = vpop.f32.mrf.mxu0
      %v1259 = vadd.f32 0.0, %v1258
      %v1260 = vpop.f32.mrf.mxu0
      %1261 = vmatprep.mubr.f32.mxu0 0.0
      %1262 = vmatmul.mubr.f32.gmra.mxu0 %v1138
      %v1263 = vpop.f32.mrf.mxu0
      %v1264 = vadd.f32 0.0, %v1263
      %v1265 = vpop.f32.mrf.mxu0
      %1266 = vmatprep.mubr.f32.mxu0 0.0
      %1267 = vmatmul.mubr.f32.gmra.mxu0 %v1141
      %v1268 = vpop.f32.mrf.mxu0
      %v1269 = vadd.f32 0.0, %v1268
      %v1270 = vpop.f32.mrf.mxu0
      %1271 = vmatprep.mubr.f32.mxu0 0.0
      %1272 = vmatmul.mubr.f32.gmra.mxu0 %v1144
      %v1273 = vpop.f32.mrf.mxu0
      %v1274 = vadd.f32 0.0, %v1273
      %v1275 = vpop.f32.mrf.mxu0
      %1276 = vmatprep.mubr.f32.mxu0 0.0
      %1277 = vmatmul.mubr.f32.gmra.mxu0 %v1147
      %v1278 = vpop.f32.mrf.mxu0
      %v1279 = vadd.f32 0.0, %v1278
      %v1280 = vpop.f32.mrf.mxu0
      %1281 = vmatprep.mubr.f32.mxu0 0.0
      %1282 = vmatmul.mubr.f32.gmra.mxu0 %v1150
      %v1283 = vpop.f32.mrf.mxu0
      %v1284 = vadd.f32 0.0, %v1283
      %v1285 = vpop.f32.mrf.mxu0
      %1286 = vmatprep.mubr.f32.mxu0 0.0
      %1287 = vmatmul.mubr.f32.gmra.mxu0 %v1153
      %v1288 = vpop.f32.mrf.mxu0
      %v1289 = vadd.f32 0.0, %v1288
      %v1290 = vpop.f32.mrf.mxu0
      %1291 = vmatprep.mubr.f32.mxu0 0.0
      %1292 = vmatmul.mubr.f32.gmra.mxu0 %v1156
      %v1293 = vpop.f32.mrf.mxu0
      %v1294 = vadd.f32 0.0, %v1293
      %v1295 = vpop.f32.mrf.mxu0
      %1296 = vmatprep.mubr.f32.mxu0 0.0
      %1297 = vmatmul.mubr.f32.gmra.mxu0 %v1159
      %v1298 = vpop.f32.mrf.mxu0
      %v1299 = vadd.f32 0.0, %v1298
      %v1300 = vpop.f32.mrf.mxu0
      %1301 = vmatprep.mubr.f32.mxu0 0.0
      %1302 = vmatmul.mubr.f32.gmra.mxu0 %v1162
      %v1303 = vpop.f32.mrf.mxu0
      %v1304 = vadd.f32 0.0, %v1303
      %v1305 = vpop.f32.mrf.mxu0
      %1306 = vmatprep.mubr.f32.mxu0 0.0
      %1307 = vmatmul.mubr.f32.gmra.mxu0 %v1165
      %v1308 = vpop.f32.mrf.mxu0
      %v1309 = vadd.f32 0.0, %v1308
      %v1310 = vpop.f32.mrf.mxu0
      %1311 = vmatprep.mubr.f32.mxu0 0.0
      %1312 = vmatmul.mubr.f32.gmra.mxu0 %v1168
      %v1313 = vpop.f32.mrf.mxu0
      %v1314 = vadd.f32 0.0, %v1313
      %v1315 = vpop.f32.mrf.mxu0
      %1316 = vmatprep.mubr.f32.mxu0 0.0
      %1317 = vmatmul.mubr.f32.gmra.mxu0 %v1171
      %v1318 = vpop.f32.mrf.mxu0
      %v1319 = vadd.f32 0.0, %v1318
      %v1320 = vpop.f32.mrf.mxu0
      %1321 = vmatprep.mubr.f32.mxu0 0.0
      %1322 = vmatmul.mubr.f32.gmra.mxu0 %v1174
      %v1323 = vpop.f32.mrf.mxu0
      %v1324 = vadd.f32 0.0, %v1323
      %v1325 = vpop.f32.mrf.mxu0
      %1326 = vmatprep.mubr.f32.mxu0 0.0
      %1327 = vmatmul.mubr.f32.gmra.mxu0 %v1177
      %v1328 = vpop.f32.mrf.mxu0
      %v1329 = vadd.f32 0.0, %v1328
      %v1330 = vpop.f32.mrf.mxu0
      %1331 = vmatprep.mubr.f32.mxu0 0.0
      %1332 = vmatmul.mubr.f32.gmra.mxu0 %v1180
      %v1333 = vpop.f32.mrf.mxu0
      %v1334 = vadd.f32 0.0, %v1333
      %v1335 = vpop.f32.mrf.mxu0
      %1336 = vdwg.mxu0
      %v1337 = vadd.f32 %v1090, %v1249
      %v1338 = vadd.f32 %v1091, %v1254
      %v1339 = vadd.f32 %v1092, %v1259
      %v1340 = vadd.f32 %v1093, %v1264
      %v1341 = vadd.f32 %v1094, %v1269
      %v1342 = vadd.f32 %v1095, %v1274
      %v1343 = vadd.f32 %v1096, %v1279
      %v1344 = vadd.f32 %v1097, %v1284
      %v1345 = vadd.f32 %v1098, %v1289
      %v1346 = vadd.f32 %v1099, %v1294
      %v1347 = vadd.f32 %v1100, %v1299
      %v1348 = vadd.f32 %v1101, %v1304
      %v1349 = vadd.f32 %v1102, %v1309
      %v1350 = vadd.f32 %v1103, %v1314
      %v1351 = vadd.f32 %v1104, %v1319
      %v1352 = vadd.f32 %v1105, %v1324
      %v1353 = vadd.f32 %v1106, %v1329
      %v1354 = vadd.f32 %v1107, %v1334
      %v1355 = vld [vmem:[#allocation2 + $0x18] sm:$0xff]
      %v1356 = vld [vmem:[#allocation2 + $0x20] sm:$0xff]
      %v1357 = vld [vmem:[#allocation2 + $0x28] sm:$0xff]
      %v1358 = vld [vmem:[#allocation2 + $0x30] sm:$0xff]
      %v1359 = vld [vmem:[#allocation2 + $0x38] sm:$0xff]
      %v1360 = vld [vmem:[#allocation2 + $0x40] sm:$0xff]
      %v1361 = vld [vmem:[#allocation2 + $0x48] sm:$0xff]
      %v1362 = vld [vmem:[#allocation2 + $0x50] sm:$0xff]
      %v1363 = vld [vmem:[#allocation2 + $0x58] sm:$0xff]
      %v1364 = vld [vmem:[#allocation2 + $0x60] sm:$0xff]
      %v1365 = vld [vmem:[#allocation2 + $0x68] sm:$0xff]
      %v1366 = vld [vmem:[#allocation2 + $0x70] sm:$0xff]
      %v1367 = vld [vmem:[#allocation2 + $0x78] sm:$0xff]
      %v1368 = vld [vmem:[#allocation2 + $0x80] sm:$0xff]
      %v1369 = vld [vmem:[#allocation2 + $0x88] sm:$0xff]
      %v1370 = vld [vmem:[#allocation2 + $0x90] sm:$0xff]
      %v1371 = vld [vmem:[#allocation2 + $0x98] sm:$0xff]
      %v1372 = vld [vmem:[#allocation2 + $0xa0] sm:$0xff]
      %s1373 = scalar_lea.vmem %s3, 32
      %v1374 = vld [vmem:[%s1373] sm:$0xff]
      %v1376 = vsel %vm357, %v1355, 0
      %v1379 = vsel %vm357, %v1356, 0
      %v1382 = vsel %vm357, %v1357, 0
      %v1385 = vsel %vm357, %v1358, 0
      %v1388 = vsel %vm357, %v1359, 0
      %v1391 = vsel %vm357, %v1360, 0
      %v1394 = vsel %vm357, %v1361, 0
      %v1397 = vsel %vm357, %v1362, 0
      %v1400 = vsel %vm357, %v1363, 0
      %v1403 = vsel %vm357, %v1364, 0
      %v1406 = vsel %vm357, %v1365, 0
      %v1409 = vsel %vm357, %v1366, 0
      %v1412 = vsel %vm357, %v1367, 0
      %v1415 = vsel %vm357, %v1368, 0
      %v1418 = vsel %vm357, %v1369, 0
      %v1421 = vsel %vm357, %v1370, 0
      %v1424 = vsel %vm357, %v1371, 0
      %v1427 = vsel %vm357, %v1372, 0
      %1429 = vmatprep.subr.mxu0 0.0
      %1430 = vmatpush1.msra.mxu0 0.0
      %1431 = vmatprep.subr.mxu0 0.0
      %1432 = vmatpush1.msra.mxu0 0.0
      %1433 = vmatprep.subr.mxu0 0.0
      %1434 = vmatpush1.msra.mxu0 0.0
      %1435 = vmatprep.subr.mxu0 0.0
      %1436 = vmatpush1.msra.mxu0 0.0
      %1437 = vmatprep.subr.mxu0 0.0
      %1438 = vmatpush1.msra.mxu0 0.0
      %1439 = vmatprep.subr.mxu0 0.0
      %1440 = vmatpush1.msra.mxu0 0.0
      %1441 = vmatprep.subr.mxu0 0.0
      %1442 = vmatpush1.msra.mxu0 0.0
      %1443 = vmatprep.subr.mxu0 0.0
      %1444 = vmatpush1.msra.mxu0 0.0
      %1445 = vmatprep.subr.mxu0 0.0
      %1446 = vmatpush1.msra.mxu0 0.0
      %1447 = vmatprep.subr.mxu0 0.0
      %1448 = vmatpush1.msra.mxu0 0.0
      %1449 = vmatprep.subr.mxu0 0.0
      %1450 = vmatpush1.msra.mxu0 0.0
      %1451 = vmatprep.subr.mxu0 0.0
      %1452 = vmatpush1.msra.mxu0 0.0
      %1453 = vmatprep.subr.mxu0 0.0
      %1454 = vmatpush1.msra.mxu0 0.0
      %1455 = vmatprep.subr.mxu0 0.0
      %1456 = vmatpush1.msra.mxu0 0.0
      %1457 = vmatprep.subr.mxu0 0.0
      %1458 = vmatpush1.msra.mxu0 0.0
      %1459 = vmatprep.subr.mxu0 0.0
      %1460 = vmatpush1.msra.mxu0 %v1374
      %1461 = vmatprep.subr.mxu0 0.0
      %1462 = vmatpush2.msra.mxu0 0.0
      %1463 = vmatprep.subr.mxu0 0.0
      %1464 = vmatpush2.msra.mxu0 0.0
      %1465 = vmatprep.subr.mxu0 0.0
      %1466 = vmatpush2.msra.mxu0 0.0
      %1467 = vmatprep.subr.mxu0 0.0
      %1468 = vmatpush2.msra.mxu0 0.0
      %1469 = vmatprep.subr.mxu0 0.0
      %1470 = vmatpush2.msra.mxu0 0.0
      %1471 = vmatprep.subr.mxu0 0.0
      %1472 = vmatpush2.msra.mxu0 0.0
      %1473 = vmatprep.subr.mxu0 0.0
      %1474 = vmatpush2.msra.mxu0 0.0
      %1475 = vmatprep.subr.mxu0 0.0
      %1476 = vmatpush2.msra.mxu0 0.0
      %1477 = vmatprep.subr.mxu0 0.0
      %1478 = vmatpush2.msra.mxu0 0.0
      %1479 = vmatprep.subr.mxu0 0.0
      %1480 = vmatpush2.msra.mxu0 0.0
      %1481 = vmatprep.subr.mxu0 0.0
      %1482 = vmatpush2.msra.mxu0 0.0
      %1483 = vmatprep.subr.mxu0 0.0
      %1484 = vmatpush2.msra.mxu0 0.0
      %1485 = vmatprep.subr.mxu0 0.0
      %1486 = vmatpush2.msra.mxu0 0.0
      %1487 = vmatprep.subr.mxu0 0.0
      %1488 = vmatpush2.msra.mxu0 0.0
      %1489 = vmatprep.subr.mxu0 0.0
      %1490 = vmatpush2.msra.mxu0 0.0
      %1491 = vmatprep.subr.mxu0 0.0
      %1492 = vmatpush2.msra.mxu0 0.0
      %1493 = vmatprep.mubr.f32.mxu0 0.0
      %1494 = vmatmul.mubr.f32.gmra.mxu0 %v1376
      %v1495 = vpop.f32.mrf.mxu0
      %v1496 = vadd.f32 0.0, %v1495
      %v1497 = vpop.f32.mrf.mxu0
      %1498 = vmatprep.mubr.f32.mxu0 0.0
      %1499 = vmatmul.mubr.f32.gmra.mxu0 %v1379
      %v1500 = vpop.f32.mrf.mxu0
      %v1501 = vadd.f32 0.0, %v1500
      %v1502 = vpop.f32.mrf.mxu0
      %1503 = vmatprep.mubr.f32.mxu0 0.0
      %1504 = vmatmul.mubr.f32.gmra.mxu0 %v1382
      %v1505 = vpop.f32.mrf.mxu0
      %v1506 = vadd.f32 0.0, %v1505
      %v1507 = vpop.f32.mrf.mxu0
      %1508 = vmatprep.mubr.f32.mxu0 0.0
      %1509 = vmatmul.mubr.f32.gmra.mxu0 %v1385
      %v1510 = vpop.f32.mrf.mxu0
      %v1511 = vadd.f32 0.0, %v1510
      %v1512 = vpop.f32.mrf.mxu0
      %1513 = vmatprep.mubr.f32.mxu0 0.0
      %1514 = vmatmul.mubr.f32.gmra.mxu0 %v1388
      %v1515 = vpop.f32.mrf.mxu0
      %v1516 = vadd.f32 0.0, %v1515
      %v1517 = vpop.f32.mrf.mxu0
      %1518 = vmatprep.mubr.f32.mxu0 0.0
      %1519 = vmatmul.mubr.f32.gmra.mxu0 %v1391
      %v1520 = vpop.f32.mrf.mxu0
      %v1521 = vadd.f32 0.0, %v1520
      %v1522 = vpop.f32.mrf.mxu0
      %1523 = vmatprep.mubr.f32.mxu0 0.0
      %1524 = vmatmul.mubr.f32.gmra.mxu0 %v1394
      %v1525 = vpop.f32.mrf.mxu0
      %v1526 = vadd.f32 0.0, %v1525
      %v1527 = vpop.f32.mrf.mxu0
      %1528 = vmatprep.mubr.f32.mxu0 0.0
      %1529 = vmatmul.mubr.f32.gmra.mxu0 %v1397
      %v1530 = vpop.f32.mrf.mxu0
      %v1531 = vadd.f32 0.0, %v1530
      %v1532 = vpop.f32.mrf.mxu0
      %1533 = vmatprep.mubr.f32.mxu0 0.0
      %1534 = vmatmul.mubr.f32.gmra.mxu0 %v1400
      %v1535 = vpop.f32.mrf.mxu0
      %v1536 = vadd.f32 0.0, %v1535
      %v1537 = vpop.f32.mrf.mxu0
      %1538 = vmatprep.mubr.f32.mxu0 0.0
      %1539 = vmatmul.mubr.f32.gmra.mxu0 %v1403
      %v1540 = vpop.f32.mrf.mxu0
      %v1541 = vadd.f32 0.0, %v1540
      %v1542 = vpop.f32.mrf.mxu0
      %1543 = vmatprep.mubr.f32.mxu0 0.0
      %1544 = vmatmul.mubr.f32.gmra.mxu0 %v1406
      %v1545 = vpop.f32.mrf.mxu0
      %v1546 = vadd.f32 0.0, %v1545
      %v1547 = vpop.f32.mrf.mxu0
      %1548 = vmatprep.mubr.f32.mxu0 0.0
      %1549 = vmatmul.mubr.f32.gmra.mxu0 %v1409
      %v1550 = vpop.f32.mrf.mxu0
      %v1551 = vadd.f32 0.0, %v1550
      %v1552 = vpop.f32.mrf.mxu0
      %1553 = vmatprep.mubr.f32.mxu0 0.0
      %1554 = vmatmul.mubr.f32.gmra.mxu0 %v1412
      %v1555 = vpop.f32.mrf.mxu0
      %v1556 = vadd.f32 0.0, %v1555
      %v1557 = vpop.f32.mrf.mxu0
      %1558 = vmatprep.mubr.f32.mxu0 0.0
      %1559 = vmatmul.mubr.f32.gmra.mxu0 %v1415
      %v1560 = vpop.f32.mrf.mxu0
      %v1561 = vadd.f32 0.0, %v1560
      %v1562 = vpop.f32.mrf.mxu0
      %1563 = vmatprep.mubr.f32.mxu0 0.0
      %1564 = vmatmul.mubr.f32.gmra.mxu0 %v1418
      %v1565 = vpop.f32.mrf.mxu0
      %v1566 = vadd.f32 0.0, %v1565
      %v1567 = vpop.f32.mrf.mxu0
      %1568 = vmatprep.mubr.f32.mxu0 0.0
      %1569 = vmatmul.mubr.f32.gmra.mxu0 %v1421
      %v1570 = vpop.f32.mrf.mxu0
      %v1571 = vadd.f32 0.0, %v1570
      %v1572 = vpop.f32.mrf.mxu0
      %1573 = vmatprep.mubr.f32.mxu0 0.0
      %1574 = vmatmul.mubr.f32.gmra.mxu0 %v1424
      %v1575 = vpop.f32.mrf.mxu0
      %v1576 = vadd.f32 0.0, %v1575
      %v1577 = vpop.f32.mrf.mxu0
      %1578 = vmatprep.mubr.f32.mxu0 0.0
      %1579 = vmatmul.mubr.f32.gmra.mxu0 %v1427
      %v1580 = vpop.f32.mrf.mxu0
      %v1581 = vadd.f32 0.0, %v1580
      %v1582 = vpop.f32.mrf.mxu0
      %1583 = vdwg.mxu0
      %v1584 = vadd.f32 %v1337, %v1496
      %v1585 = vadd.f32 %v1338, %v1501
      %v1586 = vadd.f32 %v1339, %v1506
      %v1587 = vadd.f32 %v1340, %v1511
      %v1588 = vadd.f32 %v1341, %v1516
      %v1589 = vadd.f32 %v1342, %v1521
      %v1590 = vadd.f32 %v1343, %v1526
      %v1591 = vadd.f32 %v1344, %v1531
      %v1592 = vadd.f32 %v1345, %v1536
      %v1593 = vadd.f32 %v1346, %v1541
      %v1594 = vadd.f32 %v1347, %v1546
      %v1595 = vadd.f32 %v1348, %v1551
      %v1596 = vadd.f32 %v1349, %v1556
      %v1597 = vadd.f32 %v1350, %v1561
      %v1598 = vadd.f32 %v1351, %v1566
      %v1599 = vadd.f32 %v1352, %v1571
      %v1600 = vadd.f32 %v1353, %v1576
      %v1601 = vadd.f32 %v1354, %v1581
      %v1602 = vld [vmem:[#allocation2 + $0x19] sm:$0xff]
      %v1603 = vld [vmem:[#allocation2 + $0x21] sm:$0xff]
      %v1604 = vld [vmem:[#allocation2 + $0x29] sm:$0xff]
      %v1605 = vld [vmem:[#allocation2 + $0x31] sm:$0xff]
      %v1606 = vld [vmem:[#allocation2 + $0x39] sm:$0xff]
      %v1607 = vld [vmem:[#allocation2 + $0x41] sm:$0xff]
      %v1608 = vld [vmem:[#allocation2 + $0x49] sm:$0xff]
      %v1609 = vld [vmem:[#allocation2 + $0x51] sm:$0xff]
      %v1610 = vld [vmem:[#allocation2 + $0x59] sm:$0xff]
      %v1611 = vld [vmem:[#allocation2 + $0x61] sm:$0xff]
      %v1612 = vld [vmem:[#allocation2 + $0x69] sm:$0xff]
      %v1613 = vld [vmem:[#allocation2 + $0x71] sm:$0xff]
      %v1614 = vld [vmem:[#allocation2 + $0x79] sm:$0xff]
      %v1615 = vld [vmem:[#allocation2 + $0x81] sm:$0xff]
      %v1616 = vld [vmem:[#allocation2 + $0x89] sm:$0xff]
      %v1617 = vld [vmem:[#allocation2 + $0x91] sm:$0xff]
      %v1618 = vld [vmem:[#allocation2 + $0x99] sm:$0xff]
      %v1619 = vld [vmem:[#allocation2 + $0xa1] sm:$0xff]
      %s1620 = scalar_lea.vmem %s3, 40
      %v1621 = vld [vmem:[%s1620] sm:$0xff]
      %v1623 = vsel %vm357, %v1602, 0
      %v1626 = vsel %vm357, %v1603, 0
      %v1629 = vsel %vm357, %v1604, 0
      %v1632 = vsel %vm357, %v1605, 0
      %v1635 = vsel %vm357, %v1606, 0
      %v1638 = vsel %vm357, %v1607, 0
      %v1641 = vsel %vm357, %v1608, 0
      %v1644 = vsel %vm357, %v1609, 0
      %v1647 = vsel %vm357, %v1610, 0
      %v1650 = vsel %vm357, %v1611, 0
      %v1653 = vsel %vm357, %v1612, 0
      %v1656 = vsel %vm357, %v1613, 0
      %v1659 = vsel %vm357, %v1614, 0
      %v1662 = vsel %vm357, %v1615, 0
      %v1665 = vsel %vm357, %v1616, 0
      %v1668 = vsel %vm357, %v1617, 0
      %v1671 = vsel %vm357, %v1618, 0
      %v1674 = vsel %vm357, %v1619, 0
      %1676 = vmatprep.subr.mxu0 0.0
      %1677 = vmatpush1.msra.mxu0 0.0
      %1678 = vmatprep.subr.mxu0 0.0
      %1679 = vmatpush1.msra.mxu0 0.0
      %1680 = vmatprep.subr.mxu0 0.0
      %1681 = vmatpush1.msra.mxu0 0.0
      %1682 = vmatprep.subr.mxu0 0.0
      %1683 = vmatpush1.msra.mxu0 0.0
      %1684 = vmatprep.subr.mxu0 0.0
      %1685 = vmatpush1.msra.mxu0 0.0
      %1686 = vmatprep.subr.mxu0 0.0
      %1687 = vmatpush1.msra.mxu0 0.0
      %1688 = vmatprep.subr.mxu0 0.0
      %1689 = vmatpush1.msra.mxu0 0.0
      %1690 = vmatprep.subr.mxu0 0.0
      %1691 = vmatpush1.msra.mxu0 0.0
      %1692 = vmatprep.subr.mxu0 0.0
      %1693 = vmatpush1.msra.mxu0 0.0
      %1694 = vmatprep.subr.mxu0 0.0
      %1695 = vmatpush1.msra.mxu0 0.0
      %1696 = vmatprep.subr.mxu0 0.0
      %1697 = vmatpush1.msra.mxu0 0.0
      %1698 = vmatprep.subr.mxu0 0.0
      %1699 = vmatpush1.msra.mxu0 0.0
      %1700 = vmatprep.subr.mxu0 0.0
      %1701 = vmatpush1.msra.mxu0 0.0
      %1702 = vmatprep.subr.mxu0 0.0
      %1703 = vmatpush1.msra.mxu0 0.0
      %1704 = vmatprep.subr.mxu0 0.0
      %1705 = vmatpush1.msra.mxu0 0.0
      %1706 = vmatprep.subr.mxu0 0.0
      %1707 = vmatpush1.msra.mxu0 %v1621
      %1708 = vmatprep.subr.mxu0 0.0
      %1709 = vmatpush2.msra.mxu0 0.0
      %1710 = vmatprep.subr.mxu0 0.0
      %1711 = vmatpush2.msra.mxu0 0.0
      %1712 = vmatprep.subr.mxu0 0.0
      %1713 = vmatpush2.msra.mxu0 0.0
      %1714 = vmatprep.subr.mxu0 0.0
      %1715 = vmatpush2.msra.mxu0 0.0
      %1716 = vmatprep.subr.mxu0 0.0
      %1717 = vmatpush2.msra.mxu0 0.0
      %1718 = vmatprep.subr.mxu0 0.0
      %1719 = vmatpush2.msra.mxu0 0.0
      %1720 = vmatprep.subr.mxu0 0.0
      %1721 = vmatpush2.msra.mxu0 0.0
      %1722 = vmatprep.subr.mxu0 0.0
      %1723 = vmatpush2.msra.mxu0 0.0
      %1724 = vmatprep.subr.mxu0 0.0
      %1725 = vmatpush2.msra.mxu0 0.0
      %1726 = vmatprep.subr.mxu0 0.0
      %1727 = vmatpush2.msra.mxu0 0.0
      %1728 = vmatprep.subr.mxu0 0.0
      %1729 = vmatpush2.msra.mxu0 0.0
      %1730 = vmatprep.subr.mxu0 0.0
      %1731 = vmatpush2.msra.mxu0 0.0
      %1732 = vmatprep.subr.mxu0 0.0
      %1733 = vmatpush2.msra.mxu0 0.0
      %1734 = vmatprep.subr.mxu0 0.0
      %1735 = vmatpush2.msra.mxu0 0.0
      %1736 = vmatprep.subr.mxu0 0.0
      %1737 = vmatpush2.msra.mxu0 0.0
      %1738 = vmatprep.subr.mxu0 0.0
      %1739 = vmatpush2.msra.mxu0 0.0
      %1740 = vmatprep.mubr.f32.mxu0 0.0
      %1741 = vmatmul.mubr.f32.gmra.mxu0 %v1623
      %v1742 = vpop.f32.mrf.mxu0
      %v1743 = vadd.f32 0.0, %v1742
      %v1744 = vpop.f32.mrf.mxu0
      %1745 = vmatprep.mubr.f32.mxu0 0.0
      %1746 = vmatmul.mubr.f32.gmra.mxu0 %v1626
      %v1747 = vpop.f32.mrf.mxu0
      %v1748 = vadd.f32 0.0, %v1747
      %v1749 = vpop.f32.mrf.mxu0
      %1750 = vmatprep.mubr.f32.mxu0 0.0
      %1751 = vmatmul.mubr.f32.gmra.mxu0 %v1629
      %v1752 = vpop.f32.mrf.mxu0
      %v1753 = vadd.f32 0.0, %v1752
      %v1754 = vpop.f32.mrf.mxu0
      %1755 = vmatprep.mubr.f32.mxu0 0.0
      %1756 = vmatmul.mubr.f32.gmra.mxu0 %v1632
      %v1757 = vpop.f32.mrf.mxu0
      %v1758 = vadd.f32 0.0, %v1757
      %v1759 = vpop.f32.mrf.mxu0
      %1760 = vmatprep.mubr.f32.mxu0 0.0
      %1761 = vmatmul.mubr.f32.gmra.mxu0 %v1635
      %v1762 = vpop.f32.mrf.mxu0
      %v1763 = vadd.f32 0.0, %v1762
      %v1764 = vpop.f32.mrf.mxu0
      %1765 = vmatprep.mubr.f32.mxu0 0.0
      %1766 = vmatmul.mubr.f32.gmra.mxu0 %v1638
      %v1767 = vpop.f32.mrf.mxu0
      %v1768 = vadd.f32 0.0, %v1767
      %v1769 = vpop.f32.mrf.mxu0
      %1770 = vmatprep.mubr.f32.mxu0 0.0
      %1771 = vmatmul.mubr.f32.gmra.mxu0 %v1641
      %v1772 = vpop.f32.mrf.mxu0
      %v1773 = vadd.f32 0.0, %v1772
      %v1774 = vpop.f32.mrf.mxu0
      %1775 = vmatprep.mubr.f32.mxu0 0.0
      %1776 = vmatmul.mubr.f32.gmra.mxu0 %v1644
      %v1777 = vpop.f32.mrf.mxu0
      %v1778 = vadd.f32 0.0, %v1777
      %v1779 = vpop.f32.mrf.mxu0
      %1780 = vmatprep.mubr.f32.mxu0 0.0
      %1781 = vmatmul.mubr.f32.gmra.mxu0 %v1647
      %v1782 = vpop.f32.mrf.mxu0
      %v1783 = vadd.f32 0.0, %v1782
      %v1784 = vpop.f32.mrf.mxu0
      %1785 = vmatprep.mubr.f32.mxu0 0.0
      %1786 = vmatmul.mubr.f32.gmra.mxu0 %v1650
      %v1787 = vpop.f32.mrf.mxu0
      %v1788 = vadd.f32 0.0, %v1787
      %v1789 = vpop.f32.mrf.mxu0
      %1790 = vmatprep.mubr.f32.mxu0 0.0
      %1791 = vmatmul.mubr.f32.gmra.mxu0 %v1653
      %v1792 = vpop.f32.mrf.mxu0
      %v1793 = vadd.f32 0.0, %v1792
      %v1794 = vpop.f32.mrf.mxu0
      %1795 = vmatprep.mubr.f32.mxu0 0.0
      %1796 = vmatmul.mubr.f32.gmra.mxu0 %v1656
      %v1797 = vpop.f32.mrf.mxu0
      %v1798 = vadd.f32 0.0, %v1797
      %v1799 = vpop.f32.mrf.mxu0
      %1800 = vmatprep.mubr.f32.mxu0 0.0
      %1801 = vmatmul.mubr.f32.gmra.mxu0 %v1659
      %v1802 = vpop.f32.mrf.mxu0
      %v1803 = vadd.f32 0.0, %v1802
      %v1804 = vpop.f32.mrf.mxu0
      %1805 = vmatprep.mubr.f32.mxu0 0.0
      %1806 = vmatmul.mubr.f32.gmra.mxu0 %v1662
      %v1807 = vpop.f32.mrf.mxu0
      %v1808 = vadd.f32 0.0, %v1807
      %v1809 = vpop.f32.mrf.mxu0
      %1810 = vmatprep.mubr.f32.mxu0 0.0
      %1811 = vmatmul.mubr.f32.gmra.mxu0 %v1665
      %v1812 = vpop.f32.mrf.mxu0
      %v1813 = vadd.f32 0.0, %v1812
      %v1814 = vpop.f32.mrf.mxu0
      %1815 = vmatprep.mubr.f32.mxu0 0.0
      %1816 = vmatmul.mubr.f32.gmra.mxu0 %v1668
      %v1817 = vpop.f32.mrf.mxu0
      %v1818 = vadd.f32 0.0, %v1817
      %v1819 = vpop.f32.mrf.mxu0
      %1820 = vmatprep.mubr.f32.mxu0 0.0
      %1821 = vmatmul.mubr.f32.gmra.mxu0 %v1671
      %v1822 = vpop.f32.mrf.mxu0
      %v1823 = vadd.f32 0.0, %v1822
      %v1824 = vpop.f32.mrf.mxu0
      %1825 = vmatprep.mubr.f32.mxu0 0.0
      %1826 = vmatmul.mubr.f32.gmra.mxu0 %v1674
      %v1827 = vpop.f32.mrf.mxu0
      %v1828 = vadd.f32 0.0, %v1827
      %v1829 = vpop.f32.mrf.mxu0
      %1830 = vdwg.mxu0
      %v1831 = vadd.f32 %v1584, %v1743
      %v1832 = vadd.f32 %v1585, %v1748
      %v1833 = vadd.f32 %v1586, %v1753
      %v1834 = vadd.f32 %v1587, %v1758
      %v1835 = vadd.f32 %v1588, %v1763
      %v1836 = vadd.f32 %v1589, %v1768
      %v1837 = vadd.f32 %v1590, %v1773
      %v1838 = vadd.f32 %v1591, %v1778
      %v1839 = vadd.f32 %v1592, %v1783
      %v1840 = vadd.f32 %v1593, %v1788
      %v1841 = vadd.f32 %v1594, %v1793
      %v1842 = vadd.f32 %v1595, %v1798
      %v1843 = vadd.f32 %v1596, %v1803
      %v1844 = vadd.f32 %v1597, %v1808
      %v1845 = vadd.f32 %v1598, %v1813
      %v1846 = vadd.f32 %v1599, %v1818
      %v1847 = vadd.f32 %v1600, %v1823
      %v1848 = vadd.f32 %v1601, %v1828
      %v1849 = vld [vmem:[#allocation2 + $0x27] sm:$0xff]
      %v1850 = vld [vmem:[#allocation2 + $0x2f] sm:$0xff]
      %v1851 = vld [vmem:[#allocation2 + $0x37] sm:$0xff]
      %v1852 = vld [vmem:[#allocation2 + $0x3f] sm:$0xff]
      %v1853 = vld [vmem:[#allocation2 + $0x47] sm:$0xff]
      %v1854 = vld [vmem:[#allocation2 + $0x4f] sm:$0xff]
      %v1855 = vld [vmem:[#allocation2 + $0x57] sm:$0xff]
      %v1856 = vld [vmem:[#allocation2 + $0x5f] sm:$0xff]
      %v1857 = vld [vmem:[#allocation2 + $0x67] sm:$0xff]
      %v1858 = vld [vmem:[#allocation2 + $0x6f] sm:$0xff]
      %v1859 = vld [vmem:[#allocation2 + $0x77] sm:$0xff]
      %v1860 = vld [vmem:[#allocation2 + $0x7f] sm:$0xff]
      %v1861 = vld [vmem:[#allocation2 + $0x87] sm:$0xff]
      %v1862 = vld [vmem:[#allocation2 + $0x8f] sm:$0xff]
      %v1863 = vld [vmem:[#allocation2 + $0x97] sm:$0xff]
      %v1864 = vld [vmem:[#allocation2 + $0x9f] sm:$0xff]
      %v1865 = vld [vmem:[#allocation2 + $0xa7] sm:$0xff]
      %v1866 = vld [vmem:[#allocation2 + $0xaf] sm:$0xff]
      %s1867 = scalar_lea.vmem %s3, 48
      %v1868 = vld [vmem:[%s1867] sm:$0xff]
      %v1870 = vsel %vm357, %v1849, 0
      %v1873 = vsel %vm357, %v1850, 0
      %v1876 = vsel %vm357, %v1851, 0
      %v1879 = vsel %vm357, %v1852, 0
      %v1882 = vsel %vm357, %v1853, 0
      %v1885 = vsel %vm357, %v1854, 0
      %v1888 = vsel %vm357, %v1855, 0
      %v1891 = vsel %vm357, %v1856, 0
      %v1894 = vsel %vm357, %v1857, 0
      %v1897 = vsel %vm357, %v1858, 0
      %v1900 = vsel %vm357, %v1859, 0
      %v1903 = vsel %vm357, %v1860, 0
      %v1906 = vsel %vm357, %v1861, 0
      %v1909 = vsel %vm357, %v1862, 0
      %v1912 = vsel %vm357, %v1863, 0
      %v1915 = vsel %vm357, %v1864, 0
      %v1918 = vsel %vm357, %v1865, 0
      %v1921 = vsel %vm357, %v1866, 0
      %1923 = vmatprep.subr.mxu0 0.0
      %1924 = vmatpush1.msra.mxu0 0.0
      %1925 = vmatprep.subr.mxu0 0.0
      %1926 = vmatpush1.msra.mxu0 0.0
      %1927 = vmatprep.subr.mxu0 0.0
      %1928 = vmatpush1.msra.mxu0 0.0
      %1929 = vmatprep.subr.mxu0 0.0
      %1930 = vmatpush1.msra.mxu0 0.0
      %1931 = vmatprep.subr.mxu0 0.0
      %1932 = vmatpush1.msra.mxu0 0.0
      %1933 = vmatprep.subr.mxu0 0.0
      %1934 = vmatpush1.msra.mxu0 0.0
      %1935 = vmatprep.subr.mxu0 0.0
      %1936 = vmatpush1.msra.mxu0 0.0
      %1937 = vmatprep.subr.mxu0 0.0
      %1938 = vmatpush1.msra.mxu0 0.0
      %1939 = vmatprep.subr.mxu0 0.0
      %1940 = vmatpush1.msra.mxu0 0.0
      %1941 = vmatprep.subr.mxu0 0.0
      %1942 = vmatpush1.msra.mxu0 0.0
      %1943 = vmatprep.subr.mxu0 0.0
      %1944 = vmatpush1.msra.mxu0 0.0
      %1945 = vmatprep.subr.mxu0 0.0
      %1946 = vmatpush1.msra.mxu0 0.0
      %1947 = vmatprep.subr.mxu0 0.0
      %1948 = vmatpush1.msra.mxu0 0.0
      %1949 = vmatprep.subr.mxu0 0.0
      %1950 = vmatpush1.msra.mxu0 0.0
      %1951 = vmatprep.subr.mxu0 0.0
      %1952 = vmatpush1.msra.mxu0 0.0
      %1953 = vmatprep.subr.mxu0 0.0
      %1954 = vmatpush1.msra.mxu0 %v1868
      %1955 = vmatprep.subr.mxu0 0.0
      %1956 = vmatpush2.msra.mxu0 0.0
      %1957 = vmatprep.subr.mxu0 0.0
      %1958 = vmatpush2.msra.mxu0 0.0
      %1959 = vmatprep.subr.mxu0 0.0
      %1960 = vmatpush2.msra.mxu0 0.0
      %1961 = vmatprep.subr.mxu0 0.0
      %1962 = vmatpush2.msra.mxu0 0.0
      %1963 = vmatprep.subr.mxu0 0.0
      %1964 = vmatpush2.msra.mxu0 0.0
      %1965 = vmatprep.subr.mxu0 0.0
      %1966 = vmatpush2.msra.mxu0 0.0
      %1967 = vmatprep.subr.mxu0 0.0
      %1968 = vmatpush2.msra.mxu0 0.0
      %1969 = vmatprep.subr.mxu0 0.0
      %1970 = vmatpush2.msra.mxu0 0.0
      %1971 = vmatprep.subr.mxu0 0.0
      %1972 = vmatpush2.msra.mxu0 0.0
      %1973 = vmatprep.subr.mxu0 0.0
      %1974 = vmatpush2.msra.mxu0 0.0
      %1975 = vmatprep.subr.mxu0 0.0
      %1976 = vmatpush2.msra.mxu0 0.0
      %1977 = vmatprep.subr.mxu0 0.0
      %1978 = vmatpush2.msra.mxu0 0.0
      %1979 = vmatprep.subr.mxu0 0.0
      %1980 = vmatpush2.msra.mxu0 0.0
      %1981 = vmatprep.subr.mxu0 0.0
      %1982 = vmatpush2.msra.mxu0 0.0
      %1983 = vmatprep.subr.mxu0 0.0
      %1984 = vmatpush2.msra.mxu0 0.0
      %1985 = vmatprep.subr.mxu0 0.0
      %1986 = vmatpush2.msra.mxu0 0.0
      %1987 = vmatprep.mubr.f32.mxu0 0.0
      %1988 = vmatmul.mubr.f32.gmra.mxu0 %v1870
      %v1989 = vpop.f32.mrf.mxu0
      %v1990 = vadd.f32 0.0, %v1989
      %v1991 = vpop.f32.mrf.mxu0
      %1992 = vmatprep.mubr.f32.mxu0 0.0
      %1993 = vmatmul.mubr.f32.gmra.mxu0 %v1873
      %v1994 = vpop.f32.mrf.mxu0
      %v1995 = vadd.f32 0.0, %v1994
      %v1996 = vpop.f32.mrf.mxu0
      %1997 = vmatprep.mubr.f32.mxu0 0.0
      %1998 = vmatmul.mubr.f32.gmra.mxu0 %v1876
      %v1999 = vpop.f32.mrf.mxu0
      %v2000 = vadd.f32 0.0, %v1999
      %v2001 = vpop.f32.mrf.mxu0
      %2002 = vmatprep.mubr.f32.mxu0 0.0
      %2003 = vmatmul.mubr.f32.gmra.mxu0 %v1879
      %v2004 = vpop.f32.mrf.mxu0
      %v2005 = vadd.f32 0.0, %v2004
      %v2006 = vpop.f32.mrf.mxu0
      %2007 = vmatprep.mubr.f32.mxu0 0.0
      %2008 = vmatmul.mubr.f32.gmra.mxu0 %v1882
      %v2009 = vpop.f32.mrf.mxu0
      %v2010 = vadd.f32 0.0, %v2009
      %v2011 = vpop.f32.mrf.mxu0
      %2012 = vmatprep.mubr.f32.mxu0 0.0
      %2013 = vmatmul.mubr.f32.gmra.mxu0 %v1885
      %v2014 = vpop.f32.mrf.mxu0
      %v2015 = vadd.f32 0.0, %v2014
      %v2016 = vpop.f32.mrf.mxu0
      %2017 = vmatprep.mubr.f32.mxu0 0.0
      %2018 = vmatmul.mubr.f32.gmra.mxu0 %v1888
      %v2019 = vpop.f32.mrf.mxu0
      %v2020 = vadd.f32 0.0, %v2019
      %v2021 = vpop.f32.mrf.mxu0
      %2022 = vmatprep.mubr.f32.mxu0 0.0
      %2023 = vmatmul.mubr.f32.gmra.mxu0 %v1891
      %v2024 = vpop.f32.mrf.mxu0
      %v2025 = vadd.f32 0.0, %v2024
      %v2026 = vpop.f32.mrf.mxu0
      %2027 = vmatprep.mubr.f32.mxu0 0.0
      %2028 = vmatmul.mubr.f32.gmra.mxu0 %v1894
      %v2029 = vpop.f32.mrf.mxu0
      %v2030 = vadd.f32 0.0, %v2029
      %v2031 = vpop.f32.mrf.mxu0
      %2032 = vmatprep.mubr.f32.mxu0 0.0
      %2033 = vmatmul.mubr.f32.gmra.mxu0 %v1897
      %v2034 = vpop.f32.mrf.mxu0
      %v2035 = vadd.f32 0.0, %v2034
      %v2036 = vpop.f32.mrf.mxu0
      %2037 = vmatprep.mubr.f32.mxu0 0.0
      %2038 = vmatmul.mubr.f32.gmra.mxu0 %v1900
      %v2039 = vpop.f32.mrf.mxu0
      %v2040 = vadd.f32 0.0, %v2039
      %v2041 = vpop.f32.mrf.mxu0
      %2042 = vmatprep.mubr.f32.mxu0 0.0
      %2043 = vmatmul.mubr.f32.gmra.mxu0 %v1903
      %v2044 = vpop.f32.mrf.mxu0
      %v2045 = vadd.f32 0.0, %v2044
      %v2046 = vpop.f32.mrf.mxu0
      %2047 = vmatprep.mubr.f32.mxu0 0.0
      %2048 = vmatmul.mubr.f32.gmra.mxu0 %v1906
      %v2049 = vpop.f32.mrf.mxu0
      %v2050 = vadd.f32 0.0, %v2049
      %v2051 = vpop.f32.mrf.mxu0
      %2052 = vmatprep.mubr.f32.mxu0 0.0
      %2053 = vmatmul.mubr.f32.gmra.mxu0 %v1909
      %v2054 = vpop.f32.mrf.mxu0
      %v2055 = vadd.f32 0.0, %v2054
      %v2056 = vpop.f32.mrf.mxu0
      %2057 = vmatprep.mubr.f32.mxu0 0.0
      %2058 = vmatmul.mubr.f32.gmra.mxu0 %v1912
      %v2059 = vpop.f32.mrf.mxu0
      %v2060 = vadd.f32 0.0, %v2059
      %v2061 = vpop.f32.mrf.mxu0
      %2062 = vmatprep.mubr.f32.mxu0 0.0
      %2063 = vmatmul.mubr.f32.gmra.mxu0 %v1915
      %v2064 = vpop.f32.mrf.mxu0
      %v2065 = vadd.f32 0.0, %v2064
      %v2066 = vpop.f32.mrf.mxu0
      %2067 = vmatprep.mubr.f32.mxu0 0.0
      %2068 = vmatmul.mubr.f32.gmra.mxu0 %v1918
      %v2069 = vpop.f32.mrf.mxu0
      %v2070 = vadd.f32 0.0, %v2069
      %v2071 = vpop.f32.mrf.mxu0
      %2072 = vmatprep.mubr.f32.mxu0 0.0
      %2073 = vmatmul.mubr.f32.gmra.mxu0 %v1921
      %v2074 = vpop.f32.mrf.mxu0
      %v2075 = vadd.f32 0.0, %v2074
      %v2076 = vpop.f32.mrf.mxu0
      %2077 = vdwg.mxu0
      %v2078 = vadd.f32 %v1831, %v1990
      %v2079 = vadd.f32 %v1832, %v1995
      %v2080 = vadd.f32 %v1833, %v2000
      %v2081 = vadd.f32 %v1834, %v2005
      %v2082 = vadd.f32 %v1835, %v2010
      %v2083 = vadd.f32 %v1836, %v2015
      %v2084 = vadd.f32 %v1837, %v2020
      %v2085 = vadd.f32 %v1838, %v2025
      %v2086 = vadd.f32 %v1839, %v2030
      %v2087 = vadd.f32 %v1840, %v2035
      %v2088 = vadd.f32 %v1841, %v2040
      %v2089 = vadd.f32 %v1842, %v2045
      %v2090 = vadd.f32 %v1843, %v2050
      %v2091 = vadd.f32 %v1844, %v2055
      %v2092 = vadd.f32 %v1845, %v2060
      %v2093 = vadd.f32 %v1846, %v2065
      %v2094 = vadd.f32 %v1847, %v2070
      %v2095 = vadd.f32 %v1848, %v2075
      %v2096 = vld [vmem:[#allocation2 + $0x28] sm:$0xff]
      %v2097 = vld [vmem:[#allocation2 + $0x30] sm:$0xff]
      %v2098 = vld [vmem:[#allocation2 + $0x38] sm:$0xff]
      %v2099 = vld [vmem:[#allocation2 + $0x40] sm:$0xff]
      %v2100 = vld [vmem:[#allocation2 + $0x48] sm:$0xff]
      %v2101 = vld [vmem:[#allocation2 + $0x50] sm:$0xff]
      %v2102 = vld [vmem:[#allocation2 + $0x58] sm:$0xff]
      %v2103 = vld [vmem:[#allocation2 + $0x60] sm:$0xff]
      %v2104 = vld [vmem:[#allocation2 + $0x68] sm:$0xff]
      %v2105 = vld [vmem:[#allocation2 + $0x70] sm:$0xff]
      %v2106 = vld [vmem:[#allocation2 + $0x78] sm:$0xff]
      %v2107 = vld [vmem:[#allocation2 + $0x80] sm:$0xff]
      %v2108 = vld [vmem:[#allocation2 + $0x88] sm:$0xff]
      %v2109 = vld [vmem:[#allocation2 + $0x90] sm:$0xff]
      %v2110 = vld [vmem:[#allocation2 + $0x98] sm:$0xff]
      %v2111 = vld [vmem:[#allocation2 + $0xa0] sm:$0xff]
      %v2112 = vld [vmem:[#allocation2 + $0xa8] sm:$0xff]
      %v2113 = vld [vmem:[#allocation2 + $0xb0] sm:$0xff]
      %s2114 = scalar_lea.vmem %s3, 56
      %v2115 = vld [vmem:[%s2114] sm:$0xff]
      %v2117 = vsel %vm357, %v2096, 0
      %v2120 = vsel %vm357, %v2097, 0
      %v2123 = vsel %vm357, %v2098, 0
      %v2126 = vsel %vm357, %v2099, 0
      %v2129 = vsel %vm357, %v2100, 0
      %v2132 = vsel %vm357, %v2101, 0
      %v2135 = vsel %vm357, %v2102, 0
      %v2138 = vsel %vm357, %v2103, 0
      %v2141 = vsel %vm357, %v2104, 0
      %v2144 = vsel %vm357, %v2105, 0
      %v2147 = vsel %vm357, %v2106, 0
      %v2150 = vsel %vm357, %v2107, 0
      %v2153 = vsel %vm357, %v2108, 0
      %v2156 = vsel %vm357, %v2109, 0
      %v2159 = vsel %vm357, %v2110, 0
      %v2162 = vsel %vm357, %v2111, 0
      %v2165 = vsel %vm357, %v2112, 0
      %v2168 = vsel %vm357, %v2113, 0
      %2170 = vmatprep.subr.mxu0 0.0
      %2171 = vmatpush1.msra.mxu0 0.0
      %2172 = vmatprep.subr.mxu0 0.0
      %2173 = vmatpush1.msra.mxu0 0.0
      %2174 = vmatprep.subr.mxu0 0.0
      %2175 = vmatpush1.msra.mxu0 0.0
      %2176 = vmatprep.subr.mxu0 0.0
      %2177 = vmatpush1.msra.mxu0 0.0
      %2178 = vmatprep.subr.mxu0 0.0
      %2179 = vmatpush1.msra.mxu0 0.0
      %2180 = vmatprep.subr.mxu0 0.0
      %2181 = vmatpush1.msra.mxu0 0.0
      %2182 = vmatprep.subr.mxu0 0.0
      %2183 = vmatpush1.msra.mxu0 0.0
      %2184 = vmatprep.subr.mxu0 0.0
      %2185 = vmatpush1.msra.mxu0 0.0
      %2186 = vmatprep.subr.mxu0 0.0
      %2187 = vmatpush1.msra.mxu0 0.0
      %2188 = vmatprep.subr.mxu0 0.0
      %2189 = vmatpush1.msra.mxu0 0.0
      %2190 = vmatprep.subr.mxu0 0.0
      %2191 = vmatpush1.msra.mxu0 0.0
      %2192 = vmatprep.subr.mxu0 0.0
      %2193 = vmatpush1.msra.mxu0 0.0
      %2194 = vmatprep.subr.mxu0 0.0
      %2195 = vmatpush1.msra.mxu0 0.0
      %2196 = vmatprep.subr.mxu0 0.0
      %2197 = vmatpush1.msra.mxu0 0.0
      %2198 = vmatprep.subr.mxu0 0.0
      %2199 = vmatpush1.msra.mxu0 0.0
      %2200 = vmatprep.subr.mxu0 0.0
      %2201 = vmatpush1.msra.mxu0 %v2115
      %2202 = vmatprep.subr.mxu0 0.0
      %2203 = vmatpush2.msra.mxu0 0.0
      %2204 = vmatprep.subr.mxu0 0.0
      %2205 = vmatpush2.msra.mxu0 0.0
      %2206 = vmatprep.subr.mxu0 0.0
      %2207 = vmatpush2.msra.mxu0 0.0
      %2208 = vmatprep.subr.mxu0 0.0
      %2209 = vmatpush2.msra.mxu0 0.0
      %2210 = vmatprep.subr.mxu0 0.0
      %2211 = vmatpush2.msra.mxu0 0.0
      %2212 = vmatprep.subr.mxu0 0.0
      %2213 = vmatpush2.msra.mxu0 0.0
      %2214 = vmatprep.subr.mxu0 0.0
      %2215 = vmatpush2.msra.mxu0 0.0
      %2216 = vmatprep.subr.mxu0 0.0
      %2217 = vmatpush2.msra.mxu0 0.0
      %2218 = vmatprep.subr.mxu0 0.0
      %2219 = vmatpush2.msra.mxu0 0.0
      %2220 = vmatprep.subr.mxu0 0.0
      %2221 = vmatpush2.msra.mxu0 0.0
      %2222 = vmatprep.subr.mxu0 0.0
      %2223 = vmatpush2.msra.mxu0 0.0
      %2224 = vmatprep.subr.mxu0 0.0
      %2225 = vmatpush2.msra.mxu0 0.0
      %2226 = vmatprep.subr.mxu0 0.0
      %2227 = vmatpush2.msra.mxu0 0.0
      %2228 = vmatprep.subr.mxu0 0.0
      %2229 = vmatpush2.msra.mxu0 0.0
      %2230 = vmatprep.subr.mxu0 0.0
      %2231 = vmatpush2.msra.mxu0 0.0
      %2232 = vmatprep.subr.mxu0 0.0
      %2233 = vmatpush2.msra.mxu0 0.0
      %2234 = vmatprep.mubr.f32.mxu0 0.0
      %2235 = vmatmul.mubr.f32.gmra.mxu0 %v2117
      %v2236 = vpop.f32.mrf.mxu0
      %v2237 = vadd.f32 0.0, %v2236
      %v2238 = vpop.f32.mrf.mxu0
      %2239 = vmatprep.mubr.f32.mxu0 0.0
      %2240 = vmatmul.mubr.f32.gmra.mxu0 %v2120
      %v2241 = vpop.f32.mrf.mxu0
      %v2242 = vadd.f32 0.0, %v2241
      %v2243 = vpop.f32.mrf.mxu0
      %2244 = vmatprep.mubr.f32.mxu0 0.0
      %2245 = vmatmul.mubr.f32.gmra.mxu0 %v2123
      %v2246 = vpop.f32.mrf.mxu0
      %v2247 = vadd.f32 0.0, %v2246
      %v2248 = vpop.f32.mrf.mxu0
      %2249 = vmatprep.mubr.f32.mxu0 0.0
      %2250 = vmatmul.mubr.f32.gmra.mxu0 %v2126
      %v2251 = vpop.f32.mrf.mxu0
      %v2252 = vadd.f32 0.0, %v2251
      %v2253 = vpop.f32.mrf.mxu0
      %2254 = vmatprep.mubr.f32.mxu0 0.0
      %2255 = vmatmul.mubr.f32.gmra.mxu0 %v2129
      %v2256 = vpop.f32.mrf.mxu0
      %v2257 = vadd.f32 0.0, %v2256
      %v2258 = vpop.f32.mrf.mxu0
      %2259 = vmatprep.mubr.f32.mxu0 0.0
      %2260 = vmatmul.mubr.f32.gmra.mxu0 %v2132
      %v2261 = vpop.f32.mrf.mxu0
      %v2262 = vadd.f32 0.0, %v2261
      %v2263 = vpop.f32.mrf.mxu0
      %2264 = vmatprep.mubr.f32.mxu0 0.0
      %2265 = vmatmul.mubr.f32.gmra.mxu0 %v2135
      %v2266 = vpop.f32.mrf.mxu0
      %v2267 = vadd.f32 0.0, %v2266
      %v2268 = vpop.f32.mrf.mxu0
      %2269 = vmatprep.mubr.f32.mxu0 0.0
      %2270 = vmatmul.mubr.f32.gmra.mxu0 %v2138
      %v2271 = vpop.f32.mrf.mxu0
      %v2272 = vadd.f32 0.0, %v2271
      %v2273 = vpop.f32.mrf.mxu0
      %2274 = vmatprep.mubr.f32.mxu0 0.0
      %2275 = vmatmul.mubr.f32.gmra.mxu0 %v2141
      %v2276 = vpop.f32.mrf.mxu0
      %v2277 = vadd.f32 0.0, %v2276
      %v2278 = vpop.f32.mrf.mxu0
      %2279 = vmatprep.mubr.f32.mxu0 0.0
      %2280 = vmatmul.mubr.f32.gmra.mxu0 %v2144
      %v2281 = vpop.f32.mrf.mxu0
      %v2282 = vadd.f32 0.0, %v2281
      %v2283 = vpop.f32.mrf.mxu0
      %2284 = vmatprep.mubr.f32.mxu0 0.0
      %2285 = vmatmul.mubr.f32.gmra.mxu0 %v2147
      %v2286 = vpop.f32.mrf.mxu0
      %v2287 = vadd.f32 0.0, %v2286
      %v2288 = vpop.f32.mrf.mxu0
      %2289 = vmatprep.mubr.f32.mxu0 0.0
      %2290 = vmatmul.mubr.f32.gmra.mxu0 %v2150
      %v2291 = vpop.f32.mrf.mxu0
      %v2292 = vadd.f32 0.0, %v2291
      %v2293 = vpop.f32.mrf.mxu0
      %2294 = vmatprep.mubr.f32.mxu0 0.0
      %2295 = vmatmul.mubr.f32.gmra.mxu0 %v2153
      %v2296 = vpop.f32.mrf.mxu0
      %v2297 = vadd.f32 0.0, %v2296
      %v2298 = vpop.f32.mrf.mxu0
      %2299 = vmatprep.mubr.f32.mxu0 0.0
      %2300 = vmatmul.mubr.f32.gmra.mxu0 %v2156
      %v2301 = vpop.f32.mrf.mxu0
      %v2302 = vadd.f32 0.0, %v2301
      %v2303 = vpop.f32.mrf.mxu0
      %2304 = vmatprep.mubr.f32.mxu0 0.0
      %2305 = vmatmul.mubr.f32.gmra.mxu0 %v2159
      %v2306 = vpop.f32.mrf.mxu0
      %v2307 = vadd.f32 0.0, %v2306
      %v2308 = vpop.f32.mrf.mxu0
      %2309 = vmatprep.mubr.f32.mxu0 0.0
      %2310 = vmatmul.mubr.f32.gmra.mxu0 %v2162
      %v2311 = vpop.f32.mrf.mxu0
      %v2312 = vadd.f32 0.0, %v2311
      %v2313 = vpop.f32.mrf.mxu0
      %2314 = vmatprep.mubr.f32.mxu0 0.0
      %2315 = vmatmul.mubr.f32.gmra.mxu0 %v2165
      %v2316 = vpop.f32.mrf.mxu0
      %v2317 = vadd.f32 0.0, %v2316
      %v2318 = vpop.f32.mrf.mxu0
      %2319 = vmatprep.mubr.f32.mxu0 0.0
      %2320 = vmatmul.mubr.f32.gmra.mxu0 %v2168
      %v2321 = vpop.f32.mrf.mxu0
      %v2322 = vadd.f32 0.0, %v2321
      %v2323 = vpop.f32.mrf.mxu0
      %2324 = vdwg.mxu0
      %v2325 = vadd.f32 %v2078, %v2237
      %v2326 = vadd.f32 %v2079, %v2242
      %v2327 = vadd.f32 %v2080, %v2247
      %v2328 = vadd.f32 %v2081, %v2252
      %v2329 = vadd.f32 %v2082, %v2257
      %v2330 = vadd.f32 %v2083, %v2262
      %v2331 = vadd.f32 %v2084, %v2267
      %v2332 = vadd.f32 %v2085, %v2272
      %v2333 = vadd.f32 %v2086, %v2277
      %v2334 = vadd.f32 %v2087, %v2282
      %v2335 = vadd.f32 %v2088, %v2287
      %v2336 = vadd.f32 %v2089, %v2292
      %v2337 = vadd.f32 %v2090, %v2297
      %v2338 = vadd.f32 %v2091, %v2302
      %v2339 = vadd.f32 %v2092, %v2307
      %v2340 = vadd.f32 %v2093, %v2312
      %v2341 = vadd.f32 %v2094, %v2317
      %v2342 = vadd.f32 %v2095, %v2322
      %v2343 = vld [vmem:[#allocation2 + $0x29] sm:$0xff]
      %v2344 = vld [vmem:[#allocation2 + $0x31] sm:$0xff]
      %v2345 = vld [vmem:[#allocation2 + $0x39] sm:$0xff]
      %v2346 = vld [vmem:[#allocation2 + $0x41] sm:$0xff]
      %v2347 = vld [vmem:[#allocation2 + $0x49] sm:$0xff]
      %v2348 = vld [vmem:[#allocation2 + $0x51] sm:$0xff]
      %v2349 = vld [vmem:[#allocation2 + $0x59] sm:$0xff]
      %v2350 = vld [vmem:[#allocation2 + $0x61] sm:$0xff]
      %v2351 = vld [vmem:[#allocation2 + $0x69] sm:$0xff]
      %v2352 = vld [vmem:[#allocation2 + $0x71] sm:$0xff]
      %v2353 = vld [vmem:[#allocation2 + $0x79] sm:$0xff]
      %v2354 = vld [vmem:[#allocation2 + $0x81] sm:$0xff]
      %v2355 = vld [vmem:[#allocation2 + $0x89] sm:$0xff]
      %v2356 = vld [vmem:[#allocation2 + $0x91] sm:$0xff]
      %v2357 = vld [vmem:[#allocation2 + $0x99] sm:$0xff]
      %v2358 = vld [vmem:[#allocation2 + $0xa1] sm:$0xff]
      %v2359 = vld [vmem:[#allocation2 + $0xa9] sm:$0xff]
      %v2360 = vld [vmem:[#allocation2 + $0xb1] sm:$0xff]
      %s2361 = scalar_lea.vmem %s3, 64
      %v2362 = vld [vmem:[%s2361] sm:$0xff]
      %v2364 = vsel %vm357, %v2343, 0
      %v2367 = vsel %vm357, %v2344, 0
      %v2370 = vsel %vm357, %v2345, 0
      %v2373 = vsel %vm357, %v2346, 0
      %v2376 = vsel %vm357, %v2347, 0
      %v2379 = vsel %vm357, %v2348, 0
      %v2382 = vsel %vm357, %v2349, 0
      %v2385 = vsel %vm357, %v2350, 0
      %v2388 = vsel %vm357, %v2351, 0
      %v2391 = vsel %vm357, %v2352, 0
      %v2394 = vsel %vm357, %v2353, 0
      %v2397 = vsel %vm357, %v2354, 0
      %v2400 = vsel %vm357, %v2355, 0
      %v2403 = vsel %vm357, %v2356, 0
      %v2406 = vsel %vm357, %v2357, 0
      %v2409 = vsel %vm357, %v2358, 0
      %v2412 = vsel %vm357, %v2359, 0
      %v2415 = vsel %vm357, %v2360, 0
      %2417 = vmatprep.subr.mxu0 0.0
      %2418 = vmatpush1.msra.mxu0 0.0
      %2419 = vmatprep.subr.mxu0 0.0
      %2420 = vmatpush1.msra.mxu0 0.0
      %2421 = vmatprep.subr.mxu0 0.0
      %2422 = vmatpush1.msra.mxu0 0.0
      %2423 = vmatprep.subr.mxu0 0.0
      %2424 = vmatpush1.msra.mxu0 0.0
      %2425 = vmatprep.subr.mxu0 0.0
      %2426 = vmatpush1.msra.mxu0 0.0
      %2427 = vmatprep.subr.mxu0 0.0
      %2428 = vmatpush1.msra.mxu0 0.0
      %2429 = vmatprep.subr.mxu0 0.0
      %2430 = vmatpush1.msra.mxu0 0.0
      %2431 = vmatprep.subr.mxu0 0.0
      %2432 = vmatpush1.msra.mxu0 0.0
      %2433 = vmatprep.subr.mxu0 0.0
      %2434 = vmatpush1.msra.mxu0 0.0
      %2435 = vmatprep.subr.mxu0 0.0
      %2436 = vmatpush1.msra.mxu0 0.0
      %2437 = vmatprep.subr.mxu0 0.0
      %2438 = vmatpush1.msra.mxu0 0.0
      %2439 = vmatprep.subr.mxu0 0.0
      %2440 = vmatpush1.msra.mxu0 0.0
      %2441 = vmatprep.subr.mxu0 0.0
      %2442 = vmatpush1.msra.mxu0 0.0
      %2443 = vmatprep.subr.mxu0 0.0
      %2444 = vmatpush1.msra.mxu0 0.0
      %2445 = vmatprep.subr.mxu0 0.0
      %2446 = vmatpush1.msra.mxu0 0.0
      %2447 = vmatprep.subr.mxu0 0.0
      %2448 = vmatpush1.msra.mxu0 %v2362
      %2449 = vmatprep.subr.mxu0 0.0
      %2450 = vmatpush2.msra.mxu0 0.0
      %2451 = vmatprep.subr.mxu0 0.0
      %2452 = vmatpush2.msra.mxu0 0.0
      %2453 = vmatprep.subr.mxu0 0.0
      %2454 = vmatpush2.msra.mxu0 0.0
      %2455 = vmatprep.subr.mxu0 0.0
      %2456 = vmatpush2.msra.mxu0 0.0
      %2457 = vmatprep.subr.mxu0 0.0
      %2458 = vmatpush2.msra.mxu0 0.0
      %2459 = vmatprep.subr.mxu0 0.0
      %2460 = vmatpush2.msra.mxu0 0.0
      %2461 = vmatprep.subr.mxu0 0.0
      %2462 = vmatpush2.msra.mxu0 0.0
      %2463 = vmatprep.subr.mxu0 0.0
      %2464 = vmatpush2.msra.mxu0 0.0
      %2465 = vmatprep.subr.mxu0 0.0
      %2466 = vmatpush2.msra.mxu0 0.0
      %2467 = vmatprep.subr.mxu0 0.0
      %2468 = vmatpush2.msra.mxu0 0.0
      %2469 = vmatprep.subr.mxu0 0.0
      %2470 = vmatpush2.msra.mxu0 0.0
      %2471 = vmatprep.subr.mxu0 0.0
      %2472 = vmatpush2.msra.mxu0 0.0
      %2473 = vmatprep.subr.mxu0 0.0
      %2474 = vmatpush2.msra.mxu0 0.0
      %2475 = vmatprep.subr.mxu0 0.0
      %2476 = vmatpush2.msra.mxu0 0.0
      %2477 = vmatprep.subr.mxu0 0.0
      %2478 = vmatpush2.msra.mxu0 0.0
      %2479 = vmatprep.subr.mxu0 0.0
      %2480 = vmatpush2.msra.mxu0 0.0
      %2481 = vmatprep.mubr.f32.mxu0 0.0
      %2482 = vmatmul.mubr.f32.gmra.mxu0 %v2364
      %v2483 = vpop.f32.mrf.mxu0
      %v2484 = vadd.f32 0.0, %v2483
      %v2485 = vpop.f32.mrf.mxu0
      %2486 = vmatprep.mubr.f32.mxu0 0.0
      %2487 = vmatmul.mubr.f32.gmra.mxu0 %v2367
      %v2488 = vpop.f32.mrf.mxu0
      %v2489 = vadd.f32 0.0, %v2488
      %v2490 = vpop.f32.mrf.mxu0
      %2491 = vmatprep.mubr.f32.mxu0 0.0
      %2492 = vmatmul.mubr.f32.gmra.mxu0 %v2370
      %v2493 = vpop.f32.mrf.mxu0
      %v2494 = vadd.f32 0.0, %v2493
      %v2495 = vpop.f32.mrf.mxu0
      %2496 = vmatprep.mubr.f32.mxu0 0.0
      %2497 = vmatmul.mubr.f32.gmra.mxu0 %v2373
      %v2498 = vpop.f32.mrf.mxu0
      %v2499 = vadd.f32 0.0, %v2498
      %v2500 = vpop.f32.mrf.mxu0
      %2501 = vmatprep.mubr.f32.mxu0 0.0
      %2502 = vmatmul.mubr.f32.gmra.mxu0 %v2376
      %v2503 = vpop.f32.mrf.mxu0
      %v2504 = vadd.f32 0.0, %v2503
      %v2505 = vpop.f32.mrf.mxu0
      %2506 = vmatprep.mubr.f32.mxu0 0.0
      %2507 = vmatmul.mubr.f32.gmra.mxu0 %v2379
      %v2508 = vpop.f32.mrf.mxu0
      %v2509 = vadd.f32 0.0, %v2508
      %v2510 = vpop.f32.mrf.mxu0
      %2511 = vmatprep.mubr.f32.mxu0 0.0
      %2512 = vmatmul.mubr.f32.gmra.mxu0 %v2382
      %v2513 = vpop.f32.mrf.mxu0
      %v2514 = vadd.f32 0.0, %v2513
      %v2515 = vpop.f32.mrf.mxu0
      %2516 = vmatprep.mubr.f32.mxu0 0.0
      %2517 = vmatmul.mubr.f32.gmra.mxu0 %v2385
      %v2518 = vpop.f32.mrf.mxu0
      %v2519 = vadd.f32 0.0, %v2518
      %v2520 = vpop.f32.mrf.mxu0
      %2521 = vmatprep.mubr.f32.mxu0 0.0
      %2522 = vmatmul.mubr.f32.gmra.mxu0 %v2388
      %v2523 = vpop.f32.mrf.mxu0
      %v2524 = vadd.f32 0.0, %v2523
      %v2525 = vpop.f32.mrf.mxu0
      %2526 = vmatprep.mubr.f32.mxu0 0.0
      %2527 = vmatmul.mubr.f32.gmra.mxu0 %v2391
      %v2528 = vpop.f32.mrf.mxu0
      %v2529 = vadd.f32 0.0, %v2528
      %v2530 = vpop.f32.mrf.mxu0
      %2531 = vmatprep.mubr.f32.mxu0 0.0
      %2532 = vmatmul.mubr.f32.gmra.mxu0 %v2394
      %v2533 = vpop.f32.mrf.mxu0
      %v2534 = vadd.f32 0.0, %v2533
      %v2535 = vpop.f32.mrf.mxu0
      %2536 = vmatprep.mubr.f32.mxu0 0.0
      %2537 = vmatmul.mubr.f32.gmra.mxu0 %v2397
      %v2538 = vpop.f32.mrf.mxu0
      %v2539 = vadd.f32 0.0, %v2538
      %v2540 = vpop.f32.mrf.mxu0
      %2541 = vmatprep.mubr.f32.mxu0 0.0
      %2542 = vmatmul.mubr.f32.gmra.mxu0 %v2400
      %v2543 = vpop.f32.mrf.mxu0
      %v2544 = vadd.f32 0.0, %v2543
      %v2545 = vpop.f32.mrf.mxu0
      %2546 = vmatprep.mubr.f32.mxu0 0.0
      %2547 = vmatmul.mubr.f32.gmra.mxu0 %v2403
      %v2548 = vpop.f32.mrf.mxu0
      %v2549 = vadd.f32 0.0, %v2548
      %v2550 = vpop.f32.mrf.mxu0
      %2551 = vmatprep.mubr.f32.mxu0 0.0
      %2552 = vmatmul.mubr.f32.gmra.mxu0 %v2406
      %v2553 = vpop.f32.mrf.mxu0
      %v2554 = vadd.f32 0.0, %v2553
      %v2555 = vpop.f32.mrf.mxu0
      %2556 = vmatprep.mubr.f32.mxu0 0.0
      %2557 = vmatmul.mubr.f32.gmra.mxu0 %v2409
      %v2558 = vpop.f32.mrf.mxu0
      %v2559 = vadd.f32 0.0, %v2558
      %v2560 = vpop.f32.mrf.mxu0
      %2561 = vmatprep.mubr.f32.mxu0 0.0
      %2562 = vmatmul.mubr.f32.gmra.mxu0 %v2412
      %v2563 = vpop.f32.mrf.mxu0
      %v2564 = vadd.f32 0.0, %v2563
      %v2565 = vpop.f32.mrf.mxu0
      %2566 = vmatprep.mubr.f32.mxu0 0.0
      %2567 = vmatmul.mubr.f32.gmra.mxu0 %v2415
      %v2568 = vpop.f32.mrf.mxu0
      %v2569 = vadd.f32 0.0, %v2568
      %v2570 = vpop.f32.mrf.mxu0
      %2571 = vdwg.mxu0
      %v2572 = vadd.f32 %v2325, %v2484
      %v2573 = vadd.f32 %v2326, %v2489
      %v2574 = vadd.f32 %v2327, %v2494
      %v2575 = vadd.f32 %v2328, %v2499
      %v2576 = vadd.f32 %v2329, %v2504
      %v2577 = vadd.f32 %v2330, %v2509
      %v2578 = vadd.f32 %v2331, %v2514
      %v2579 = vadd.f32 %v2332, %v2519
      %v2580 = vadd.f32 %v2333, %v2524
      %v2581 = vadd.f32 %v2334, %v2529
      %v2582 = vadd.f32 %v2335, %v2534
      %v2583 = vadd.f32 %v2336, %v2539
      %v2584 = vadd.f32 %v2337, %v2544
      %v2585 = vadd.f32 %v2338, %v2549
      %v2586 = vadd.f32 %v2339, %v2554
      %v2587 = vadd.f32 %v2340, %v2559
      %v2588 = vadd.f32 %v2341, %v2564
      %v2589 = vadd.f32 %v2342, %v2569
      %v2590 = vld [vmem:[%s4] sm:$0x1]
      %v2592 = vlaneseq
      %v2593 = vshrl.u32 %v2592, 7
      %v2594 = vsub.s32 0, %v2593
      %v2595 = vrot.slane %v2590, %v2594
      %v2597 = vadd.f32 %v2572, %v2595
      %v2598 = vadd.f32 %v2573, %v2595
      %v2599 = vadd.f32 %v2574, %v2595
      %v2600 = vadd.f32 %v2575, %v2595
      %v2601 = vadd.f32 %v2576, %v2595
      %v2602 = vadd.f32 %v2577, %v2595
      %v2603 = vadd.f32 %v2578, %v2595
      %v2604 = vadd.f32 %v2579, %v2595
      %v2605 = vadd.f32 %v2580, %v2595
      %v2606 = vadd.f32 %v2581, %v2595
      %v2607 = vadd.f32 %v2582, %v2595
      %v2608 = vadd.f32 %v2583, %v2595
      %v2609 = vadd.f32 %v2584, %v2595
      %v2610 = vadd.f32 %v2585, %v2595
      %v2611 = vadd.f32 %v2586, %v2595
      %v2612 = vadd.f32 %v2587, %v2595
      %v2613 = vadd.f32 %v2588, %v2595
      %v2614 = vadd.f32 %v2589, %v2595
      %v2615 = vmax.f32 %v2597, 0.0
      %v2616 = vmax.f32 %v2598, 0.0
      %v2617 = vmax.f32 %v2599, 0.0
      %v2618 = vmax.f32 %v2600, 0.0
      %v2619 = vmax.f32 %v2601, 0.0
      %v2620 = vmax.f32 %v2602, 0.0
      %v2621 = vmax.f32 %v2603, 0.0
      %v2622 = vmax.f32 %v2604, 0.0
      %v2623 = vmax.f32 %v2605, 0.0
      %v2624 = vmax.f32 %v2606, 0.0
      %v2625 = vmax.f32 %v2607, 0.0
      %v2626 = vmax.f32 %v2608, 0.0
      %v2627 = vmax.f32 %v2609, 0.0
      %v2628 = vmax.f32 %v2610, 0.0
      %v2629 = vmax.f32 %v2611, 0.0
      %v2630 = vmax.f32 %v2612, 0.0
      %v2631 = vmax.f32 %v2613, 0.0
      %v2632 = vmax.f32 %v2614, 0.0
      %vm2633 = vcmask 56320
      %2634 = vst.msk [vmem:[%s355] sm:$0xff] %vm2633, %v2615
      %2635 = vst.msk [vmem:[%s355 + $0x8] sm:$0xff] %vm2633, %v2616
      %2636 = vst.msk [vmem:[%s355 + $0x10] sm:$0xff] %vm2633, %v2617
      %2637 = vst.msk [vmem:[%s355 + $0x18] sm:$0xff] %vm2633, %v2618
      %2638 = vst.msk [vmem:[%s355 + $0x20] sm:$0xff] %vm2633, %v2619
      %2639 = vst.msk [vmem:[%s355 + $0x28] sm:$0xff] %vm2633, %v2620
      %2640 = vst.msk [vmem:[%s355 + $0x30] sm:$0xff] %vm2633, %v2621
      %2641 = vst.msk [vmem:[%s355 + $0x38] sm:$0xff] %vm2633, %v2622
      %2642 = vst.msk [vmem:[%s355 + $0x40] sm:$0xff] %vm2633, %v2623
      %2643 = vst.msk [vmem:[%s355 + $0x48] sm:$0xff] %vm2633, %v2624
      %2644 = vst.msk [vmem:[%s355 + $0x50] sm:$0xff] %vm2633, %v2625
      %2645 = vst.msk [vmem:[%s355 + $0x58] sm:$0xff] %vm2633, %v2626
      %2646 = vst.msk [vmem:[%s355 + $0x60] sm:$0xff] %vm2633, %v2627
      %2647 = vst.msk [vmem:[%s355 + $0x68] sm:$0xff] %vm2633, %v2628
      %2648 = vst.msk [vmem:[%s355 + $0x70] sm:$0xff] %vm2633, %v2629
      %2649 = vst.msk [vmem:[%s355 + $0x78] sm:$0xff] %vm2633, %v2630
      %2650 = vst.msk [vmem:[%s355 + $0x80] sm:$0xff] %vm2633, %v2631
      %2651 = vst.msk [vmem:[%s355 + $0x88] sm:$0xff] %vm2633, %v2632
      %s2652 = smul.u32 18, %s21
      %p2653 = scmp.lt.s32.totalorder %s20, 1
      %s2654 = scalar_select %p2653, %s20, 1
      %p2655 = scmp.lt.s32.totalorder %s2652, 17
      %s2656 = scalar_select %p2655, %s2652, 17
      %s2657 = smul.addr %s2654, 18
      %s2658 = sadd.s32 %s2656, %s2657
      %s2659 = smul.addr %s2658, 8
      %s2660 = scalar_lea.vmem %s5, %s2659
      // Predicated region
      $region41: #{tpu_custom_call.1} parent=39 // pred_check
        %p2661 = pneg %p180
      $region42: #{tpu_custom_call.1} parent=39 // pred_check_branch
        %2663 = sbr.rel (%p2661) target = $region44
      $region43: #{tpu_custom_call.1} parent=39 // pred_region
        %s2664 = smul.u32 18, %s21
      $region44: #{tpu_custom_call.1} parent=39 // pred_fallthru
        _
    $region40: #{tpu_custom_call.1} parent=5 // pred_fallthru
      _
    %p2665 = scmp.le.s32.totalorder 2, %s11
    // Predicated region
    $region45: #{tpu_custom_call.1} parent=5 // pred_check
      %p2666 = pneg %p2665
    $region46: #{tpu_custom_call.1} parent=5 // pred_check_branch
      %2668 = sbr.rel (%p2666) target = $region48
    $region47: #{tpu_custom_call.1} parent=5 // pred_region
      %s2669 = ssub.s32 %s11, 2
      // Predicated region
      $region49: #{tpu_custom_call.1} parent=47 // pred_check
        %p2670 = pneg %p186
      $region50: #{tpu_custom_call.1} parent=47 // pred_check_branch
        %2672 = sbr.rel (%p2670) target = $region52
      $region51: #{tpu_custom_call.1} parent=47 // pred_region
        %s2673 = smul.u32 18, %s23
        %p2674 = scmp.lt.s32.totalorder %s22, 1
        %s2675 = scalar_select %p2674, %s22, 1
        %p2676 = scmp.lt.s32.totalorder %s2673, 17
        %s2677 = scalar_select %p2676, %s2673, 17
        %s2678 = smul.addr %s2675, 18
        %s2679 = sadd.s32 %s2677, %s2678
        %s2680 = smul.addr %s2679, 8
        %s2681 = scalar_lea.vmem %s5, %s2680
      $region52: #{tpu_custom_call.1} parent=47 // pred_fallthru
        _
    $region48: #{tpu_custom_call.1} parent=5 // pred_fallthru
      _
  $region6: #{tpu_custom_call.1} parent=0 // loop_footer
    %s15 = sadd.s32 1, %s11
  $region7: #{tpu_custom_call.1} parent=0 // loop_footer_branch
    %10 = sbr.rel target = $region3
  $region8: #{tpu_custom_call.1} parent=0 // loop_exit
    _

</llo_original>
